<compile_context>
chip_gen: v5e
topology: v5e:2x2
jax: 0.10.0
libtpu: 0.0.40
codegen_flags: <defaults>
</compile_context>

<pallas_src>
import functools

import jax
import jax.numpy as jnp
from jax import lax
from jax.experimental import pallas as pl
from jax.experimental.pallas import tpu as pltpu

LANE = 128                            # lane width / MXU alignment for feature dims
N_ALIGN = 512                         # node-count padding multiple (tiles stay 256-aligned)
K_TILE = 512                          # contraction tile over nodes (multiple of 256)
Y_RESIDENT_BYTES = 8 * 1024 * 1024    # keep the (n_pad, 128) activation VMEM-resident if it fits
VMEM_LIMIT = 40 * 1024 * 1024         # < ~48 MiB usable on v7x; ample headroom on v5e/v6e


# ---------------------------------------------------------------------------
# Kernels
# ---------------------------------------------------------------------------
def gcn_layer_kernel(a_ref, y_ref, b_ref, out_ref, acc_ref, *,
                     apply_relu, k_tile, y_resident):
    """One GCN layer for a row tile: out = act(A[rows, :] @ Y + b), Y = X @ W precomputed."""
    k = pl.program_id(1)

    @pl.when(k == 0)
    def _():
        acc_ref[...] = jnp.zeros_like(acc_ref)

    if y_resident:
        # Y is fully resident in VMEM; slice the contraction window for this step.
        start = pl.multiple_of(k * k_tile, k_tile)
        y = y_ref[pl.ds(start, k_tile), :]
    else:
        y = y_ref[...]

    # Accumulate the N^2 term in f32; A and Y tiles are bf16 MXU operands.
    acc_ref[...] += jnp.dot(a_ref[...], y, preferred_element_type=jnp.float32)

    @pl.when(k == pl.num_programs(1) - 1)
    def _():
        h = acc_ref[...] + b_ref[...]          # bias in f32 (VPU)
        if apply_relu:
            h = jnp.maximum(h, 0.0)
        out_ref[...] = h.astype(out_ref.dtype)


def head_kernel(pool_ref, h_ref, wl_ref, bl_ref, inv_ref, out_ref, acc_ref, *, num_experts):
    """pooled = (onehot @ h) * inv_counts; logits = pooled @ Wl + bl; masked log_softmax."""
    k = pl.program_id(0)

    @pl.when(k == 0)
    def _():
        acc_ref[...] = jnp.zeros_like(acc_ref)

    acc_ref[...] += jnp.dot(pool_ref[...], h_ref[...],
                            preferred_element_type=jnp.float32)

    @pl.when(k == pl.num_programs(0) - 1)
    def _():
        pooled = acc_ref[...] * inv_ref[...]                         # exact mean, f32
        logits = jnp.dot(pooled, wl_ref[...],                        # f32 Linear (tiny)
                         preferred_element_type=jnp.float32) + bl_ref[...]
        # Mask padded expert lanes so they do not contribute to the softmax.
        lane_id = lax.broadcasted_iota(jnp.int32, logits.shape, 1)
        logits = jnp.where(lane_id < num_experts, logits,
                           jnp.full_like(logits, -1e30))
        m = jnp.max(logits, axis=1, keepdims=True)
        z = logits - m
        lse = jnp.log(jnp.sum(jnp.exp(z), axis=1, keepdims=True))
        out_ref[...] = (z - lse).astype(out_ref.dtype)


# ---------------------------------------------------------------------------
# pallas_call wrappers
# ---------------------------------------------------------------------------
def _gcn_layer(a, y, b, *, apply_relu):
    n_pad = a.shape[0]
    h_pad = y.shape[1]

    # >= 2 row tiles so the "parallel" axis splits across v7x's two TensorCores.
    row_tile = 512 if n_pad >= 1024 else 256
    k_tile = min(K_TILE, n_pad)
    grid = (n_pad // row_tile, n_pad // k_tile)

    y_bytes = int(y.size) * y.dtype.itemsize
    y_resident = y_bytes <= Y_RESIDENT_BYTES
    if y_resident:
        # Constant index map -> single DMA, Y stays resident across the whole grid.
        y_spec = pl.BlockSpec((n_pad, h_pad), lambda i, k: (0, 0))
        y_traffic = y_bytes
    else:
        # Fallback for very large graphs: stream Y, re-fetched once per row tile.
        y_spec = pl.BlockSpec((k_tile, h_pad), lambda i, k: (k, 0))
        y_traffic = y_bytes * grid[0]

    flops = 2 * n_pad * n_pad * h_pad
    bytes_accessed = (int(a.size) * a.dtype.itemsize + y_traffic
                      + int(b.size) * b.dtype.itemsize + n_pad * h_pad * 2)

    return pl.pallas_call(
        functools.partial(gcn_layer_kernel, apply_relu=apply_relu,
                          k_tile=k_tile, y_resident=y_resident),
        out_shape=jax.ShapeDtypeStruct((n_pad, h_pad), jnp.bfloat16),
        grid_spec=pltpu.PrefetchScalarGridSpec(
            num_scalar_prefetch=0,
            grid=grid,
            in_specs=[
                pl.BlockSpec((row_tile, k_tile), lambda i, k: (i, k)),  # A tile (streamed)
                y_spec,                                                 # Y (resident/streamed)
                pl.BlockSpec((1, h_pad), lambda i, k: (0, 0)),          # bias (resident)
            ],
            out_specs=pl.BlockSpec((row_tile, h_pad), lambda i, k: (i, 0)),
            scratch_shapes=[pltpu.VMEM((row_tile, h_pad), jnp.float32)],
        ),
        compiler_params=pltpu.CompilerParams(
            dimension_semantics=("parallel", "arbitrary"),
            vmem_limit_bytes=VMEM_LIMIT,
        ),
        cost_estimate=pl.CostEstimate(flops=flops, transcendentals=0,
                                      bytes_accessed=bytes_accessed),
    )(a, y, b)


def _head_k_tile(n_pad):
    if n_pad <= 4096:
        return n_pad
    for cand in (4096, 2048, 1024, 512):
        if n_pad % cand == 0:
            return cand
    return 512


def _pool_head(pool, h, wl, bl, inv_counts, num_experts):
    num_graphs, n_pad = pool.shape
    h_pad = h.shape[1]
    e_pad = wl.shape[1]
    hk = _head_k_tile(n_pad)
    grid = (n_pad // hk,)

    flops = 2 * num_graphs * n_pad * h_pad + 2 * num_graphs * h_pad * e_pad
    bytes_accessed = (int(pool.size) * pool.dtype.itemsize
                      + int(h.size) * h.dtype.itemsize
                      + int(wl.size) * wl.dtype.itemsize
                      + num_graphs * e_pad * 4)

    return pl.pallas_call(
        functools.partial(head_kernel, num_experts=num_experts),
        out_shape=jax.ShapeDtypeStruct((num_graphs, e_pad), jnp.float32),
        grid_spec=pltpu.PrefetchScalarGridSpec(
            num_scalar_prefetch=0,
            grid=grid,
            in_specs=[
                pl.BlockSpec((num_graphs, hk), lambda k: (0, k)),   # one-hot pool tile
                pl.BlockSpec((hk, h_pad), lambda k: (k, 0)),        # h2 tile
                pl.BlockSpec((h_pad, e_pad), lambda k: (0, 0)),     # Wl (f32, resident)
                pl.BlockSpec((1, e_pad), lambda k: (0, 0)),         # bl
                pl.BlockSpec((num_graphs, 1), lambda k: (0, 0)),    # 1/count per graph (f32)
            ],
            out_specs=pl.BlockSpec((num_graphs, e_pad), lambda k: (0, 0)),
            scratch_shapes=[pltpu.VMEM((num_graphs, h_pad), jnp.float32)],
        ),
        compiler_params=pltpu.CompilerParams(
            dimension_semantics=("arbitrary",),
            vmem_limit_bytes=VMEM_LIMIT,
        ),
        cost_estimate=pl.CostEstimate(flops=flops,
                                      transcendentals=2 * num_graphs * e_pad,
                                      bytes_accessed=bytes_accessed),
    )(pool, h, wl, bl, inv_counts)


# ---------------------------------------------------------------------------
# Graph -> dense preprocessing, padding, full forward
# ---------------------------------------------------------------------------
def _round_up(x, m):
    return ((x + m - 1) // m) * m


def _pad2d(x, rows, cols, dtype):
    out = jnp.zeros((rows, cols), dtype)
    return out.at[: x.shape[0], : x.shape[1]].set(x.astype(dtype))


def build_normalized_adjacency(edge_index, num_nodes):
    """Dense D^{-1/2} (A + I) D^{-1/2} matching PyG GCNConv (add_remaining_self_loops)."""
    src, dst = edge_index[0], edge_index[1]
    a = jnp.zeros((num_nodes, num_nodes), jnp.float32).at[dst, src].add(1.0)
    diag = jnp.diagonal(a)
    a = a + jnp.diag(jnp.where(diag > 0.0, 0.0, 1.0))
    deg = jnp.sum(a, axis=1)
    dinv = jnp.where(deg > 0.0, lax.rsqrt(deg), 0.0)
    return dinv[:, None] * a * dinv[None, :]


def build_mean_pool(batch, num_graphs, num_nodes):
    """Exact one-hot [B, N] membership matrix and per-graph 1/count (f32, [B, 1])."""
    onehot = (batch[None, :] == jnp.arange(num_graphs)[:, None]).astype(jnp.float32)
    counts = jnp.maximum(jnp.sum(onehot, axis=1, keepdims=True), 1.0)
    return onehot, (1.0 / counts).astype(jnp.float32)


def gating_gcn_forward(x, edge_index, batch, num_graphs, params):
    w1, b1, w2, b2, wl, bl = params
    n, _ = x.shape
    hidden = w1.shape[1]
    num_experts = wl.shape[1]

    n_pad = _round_up(n, N_ALIGN)
    h_pad = _round_up(hidden, LANE)
    e_pad = _round_up(num_experts, LANE)

    a = build_normalized_adjacency(edge_index, n)
    onehot, inv_counts = build_mean_pool(batch, num_graphs, n)

    # bf16 MXU operands with zero padding: padded columns of A / one-hot are exactly zero,
    # so padded nodes never contaminate real outputs. The 0/1 one-hot is exact in bf16.
    a_p = _pad2d(a, n_pad, n_pad, jnp.bfloat16)
    pool_p = _pad2d(onehot, num_graphs, n_pad, jnp.bfloat16)
    w2_p = _pad2d(w2, h_pad, h_pad, jnp.bfloat16)
    wl_p = _pad2d(wl, h_pad, e_pad, jnp.float32)            # Linear kept in f32 (tiny)
    b1_p = _pad2d(b1.reshape(1, -1), 1, h_pad, jnp.float32)
    b2_p = _pad2d(b2.reshape(1, -1), 1, h_pad, jnp.float32)
    bl_p = _pad2d(bl.reshape(1, -1), 1, e_pad, jnp.float32)

    # Pre-apply the small weight matmul in f32 (exact reassociation A @ (X @ W1)).
    y1 = jnp.dot(x, w1, preferred_element_type=jnp.float32)          # [N, H] f32
    y1_p = _pad2d(y1, n_pad, h_pad, jnp.bfloat16)

    # Layer 1: relu(A @ Y1 + b1)
    h1 = _gcn_layer(a_p, y1_p, b1_p, apply_relu=True)
    # Dropout(p=0.5) in eval mode is the identity.
    # TODO(synk): training-mode dropout (RNG mask) not implemented; inference semantics only.

    # Layer 2: A @ (h1 @ W2) + b2 (needs all rows of h1 -> separate pallas_call)
    y2 = jnp.dot(h1, w2_p, preferred_element_type=jnp.float32).astype(jnp.bfloat16)
    h2 = _gcn_layer(a_p, y2, b2_p, apply_relu=False)

    # Head: exact mean pool then Linear + masked log_softmax; slice the padded expert lanes.
    out_pad = _pool_head(pool_p, h2, wl_p, bl_p, inv_counts, num_experts)
    return out_pad[:, :num_experts]


def reference_forward(x, a, pool, w1, b1, w2, b2, wl, bl):
    """Pure-JAX f32 reference matching the PyTorch module semantics (eval mode)."""
    h = jnp.maximum(a @ (x @ w1) + b1[None, :], 0.0)
    h = a @ (h @ w2) + b2[None, :]
    logits = (pool @ h) @ wl + bl[None, :]
    return jax.nn.log_softmax(logits, axis=1)


if __name__ == "__main__":
    key = jax.random.PRNGKey(0)

    # Small shapes consistent with the module.
    N = 16        # total nodes across the batch of graphs
    F_IN = 8      # input_dim
    H = 32        # hidden_channels
    E = 4         # num_experts
    B = 2         # number of graphs in the batch

    keys = jax.random.split(key, 8)

    x = jax.random.normal(keys[0], (N, F_IN), jnp.float32)

    # Two ring graphs of 8 nodes each (edges stored in both directions).
    idx = jnp.arange(N)
    ring_src = jnp.concatenate([idx, (idx + 1) % N])
    ring_dst = jnp.concatenate([(idx + 1) % N, idx])
    same_graph = (ring_src // 8) == (ring_dst // 8)
    edge_index = jnp.stack([ring_src[same_graph], ring_dst[same_graph]], axis=0)
    batch = idx // 8

    w1 = jax.random.normal(keys[1], (F_IN, H), jnp.float32) * 0.1
    b1 = jax.random.normal(keys[2], (H,), jnp.float32) * 0.1
    w2 = jax.random.normal(keys[3], (H, H), jnp.float32) * 0.1
    b2 = jax.random.normal(keys[4], (H,), jnp.float32) * 0.1
    wl = jax.random.normal(keys[5], (H, E), jnp.float32) * 0.1
    bl = jax.random.normal(keys[6], (E,), jnp.float32) * 0.1
    params = (w1, b1, w2, b2, wl, bl)

    out = gating_gcn_forward(x, edge_index, batch, B, params)
    out = jax.block_until_ready(out)

    assert out.shape == (B, E)
    assert bool(jnp.all(jnp.isfinite(out)))
    # log_softmax rows must exp-sum to 1 (padded expert lanes masked out).
    assert jnp.allclose(jnp.sum(jnp.exp(out), axis=1), 1.0, atol=1e-4)

    # Compare against the pure-JAX f32 reference (bf16 MXU inputs -> modest tolerance).
    a_dense = build_normalized_adjacency(edge_index, N)
    onehot_ref, inv_ref = build_mean_pool(batch, B, N)
    pool_dense = onehot_ref * inv_ref
    ref = reference_forward(x, a_dense, pool_dense, w1, b1, w2, b2, wl, bl)
    assert jnp.allclose(out, ref, atol=5e-2, rtol=5e-2)

    print("KERNEL_OK")
</pallas_src>

<mosaic_0001>
module attributes {stable_mosaic.version = 11 : i64} {
  func.func @gcn_layer_kernel(%arg0: i32, %arg1: i32, %arg2: memref<256x512xbf16, #tpu.memory_space<vmem>>, %arg3: memref<512x128xbf16, #tpu.memory_space<vmem>>, %arg4: memref<1x128xf32, #tpu.memory_space<vmem>>, %arg5: memref<256x128xbf16, #tpu.memory_space<vmem>>, %arg6: memref<256x128xf32, #tpu.memory_space<vmem>>) attributes {dimension_semantics = [#tpu.dimension_semantics<parallel>, #tpu.dimension_semantics<arbitrary>], iteration_bounds = array<i64: 2, 1>, scalar_prefetch = 0 : i64, scratch_operands = 1 : i64, tpu.core_type = #tpu.core_type<tc>, window_params = [{transform_indices = @transform_0, window_bounds = array<i64: 256, 512>}, {pipeline_mode = #tpu.pipeline_mode<synchronous>, transform_indices = @transform_1, window_bounds = array<i64: 512, 128>}, {pipeline_mode = #tpu.pipeline_mode<synchronous>, transform_indices = @transform_2, window_bounds = array<i64: 1, 128>}, {transform_indices = @transform_3, window_bounds = array<i64: 256, 128>}]} {
    %c0_i32 = arith.constant 0 : i32
    %0 = arith.cmpi eq, %arg1, %c0_i32 : i32
    %1 = arith.extui %0 : i1 to i32
    %c0_i32_0 = arith.constant 0 : i32
    %2 = arith.cmpi ne, %1, %c0_i32_0 : i32
    scf.if %2 {
      %cst_9 = arith.constant 0.000000e+00 : f32
      %15 = vector.broadcast %cst_9 : f32 to vector<256x128xf32>
      %c0_10 = arith.constant 0 : index
      %c0_11 = arith.constant 0 : index
      %16 = vector.load %arg6[%c0_10, %c0_11] : memref<256x128xf32, #tpu.memory_space<vmem>>, vector<256x128xf32>
      tpu.vector_store %arg6[%c0_10, %c0_11], %15 {strides = array<i32>} : memref<256x128xf32, #tpu.memory_space<vmem>>, vector<256x128xf32>,
    } else {
    }
    %c512_i32 = arith.constant 512 : i32
    %3 = arith.muli %arg1, %c512_i32 : i32
    %4 = tpu.assume_multiple %3, 512 : i32
    %5 = arith.index_cast %4 : i32 to index
    %c0 = arith.constant 0 : index
    %6 = vector.load %arg3[%5, %c0] : memref<512x128xbf16, #tpu.memory_space<vmem>>, vector<512x128xbf16>
    %c0_1 = arith.constant 0 : index
    %c0_2 = arith.constant 0 : index
    %7 = vector.load %arg6[%c0_1, %c0_2] : memref<256x128xf32, #tpu.memory_space<vmem>>, vector<256x128xf32>
    %c0_3 = arith.constant 0 : index
    %c0_4 = arith.constant 0 : index
    %8 = vector.load %arg2[%c0_3, %c0_4] : memref<256x512xbf16, #tpu.memory_space<vmem>>, vector<256x512xbf16>
    %cst = arith.constant dense<0.000000e+00> : vector<256x128xf32>
    %9 = tpu.matmul %8, %6, %cst {dimension_numbers = #tpu.dot_dimension_numbers<[1], [0], [0], [1], [0, 0, 1, 1], [], []>} : vector<256x512xbf16>, vector<512x128xbf16>, vector<256x128xf32> -> vector<256x128xf32>
    %10 = arith.addf %7, %9 : vector<256x128xf32>
    %c0_5 = arith.constant 0 : index
    %c0_6 = arith.constant 0 : index
    %11 = vector.load %arg6[%c0_5, %c0_6] : memref<256x128xf32, #tpu.memory_space<vmem>>, vector<256x128xf32>
    tpu.vector_store %arg6[%c0_5, %c0_6], %10 {strides = array<i32>} : memref<256x128xf32, #tpu.memory_space<vmem>>, vector<256x128xf32>,
    %c0_i32_7 = arith.constant 0 : i32
    %12 = arith.cmpi eq, %arg1, %c0_i32_7 : i32
    %13 = arith.extui %12 : i1 to i32
    %c0_i32_8 = arith.constant 0 : i32
    %14 = arith.cmpi ne, %13, %c0_i32_8 : i32
    scf.if %14 {
      %c0_9 = arith.constant 0 : index
      %c0_10 = arith.constant 0 : index
      %15 = vector.load %arg6[%c0_9, %c0_10] : memref<256x128xf32, #tpu.memory_space<vmem>>, vector<256x128xf32>
      %c0_11 = arith.constant 0 : index
      %c0_12 = arith.constant 0 : index
      %16 = vector.load %arg4[%c0_11, %c0_12] : memref<1x128xf32, #tpu.memory_space<vmem>>, vector<1x128xf32>
      %17 = vector.broadcast %16 : vector<1x128xf32> to vector<256x128xf32>
      %18 = arith.addf %15, %17 : vector<256x128xf32>
      %cst_13 = arith.constant 0.000000e+00 : f32
      %19 = vector.broadcast %cst_13 : f32 to vector<256x128xf32>
      %20 = arith.maximumf %18, %19 : vector<256x128xf32>
      %21 = arith.truncf %20 : vector<256x128xf32> to vector<256x128xbf16>
      %c0_14 = arith.constant 0 : index
      %c0_15 = arith.constant 0 : index
      %22 = vector.load %arg5[%c0_14, %c0_15] : memref<256x128xbf16, #tpu.memory_space<vmem>>, vector<256x128xbf16>
      tpu.vector_store %arg5[%c0_14, %c0_15], %21 {strides = array<i32>} : memref<256x128xbf16, #tpu.memory_space<vmem>>, vector<256x128xbf16>,
    } else {
    }
    return
  }
  func.func @transform_0(%arg0: i32, %arg1: i32) -> (i32, i32) {
    %c0_i32 = arith.constant 0 : i32
    return %arg0, %arg1 : i32, i32
  }
  func.func @transform_1(%arg0: i32, %arg1: i32) -> (i32, i32) {
    %c0_i32 = arith.constant 0 : i32
    %c0_i32_0 = arith.constant 0 : i32
    %c0_i32_1 = arith.constant 0 : i32
    return %c0_i32, %c0_i32_0 : i32, i32
  }
  func.func @transform_2(%arg0: i32, %arg1: i32) -> (i32, i32) {
    %c0_i32 = arith.constant 0 : i32
    %c0_i32_0 = arith.constant 0 : i32
    %c0_i32_1 = arith.constant 0 : i32
    return %c0_i32, %c0_i32_0 : i32, i32
  }
  func.func @transform_3(%arg0: i32, %arg1: i32) -> (i32, i32) {
    %c0_i32 = arith.constant 0 : i32
    %c0_i32_0 = arith.constant 0 : i32
    return %arg0, %c0_i32 : i32, i32
  }
}

</mosaic_0001>

<llo_original>
// kernel: tpu_custom_call.1
$region0: #{tpu_custom_call.1}
  #allocation0 [shape = 'u32[]', space=smem, size = 0x4, offset = 0x4, fixed_abs, tag = 'smem constant byte address 0x4 - core index']
  #allocation1 [shape = 'u32[72,128]{1,0:T(1,128)}', space=vmem, size = 0x9000, scoped, tag = 'internal scratch']
  #allocation2 [shape = 'f32[256,128]{1,0:T(8,128)}', space=vmem, size = 0x20000, scoped, tag = 'scratch operand']
  %s0 = inlined_call_operand.hbm [shape: bf16[512,512], index: 0, kind: input, shape index: {}]
  %s1 = inlined_call_operand.hbm [shape: bf16[512,128], index: 1, kind: input, shape index: {}]
  %s2 = inlined_call_operand.vmem [shape: f32[1,128], index: 2, kind: input, shape index: {}]
  %s3 = inlined_call_operand.hbm [shape: bf16[512,128], index: 3, kind: output, shape index: {}]
  %s4 = sld [smem:[#allocation0]]
  $region61: #{tpu_custom_call.1} parent=0
    _
  %s6 = ssub.s32 1, %s4
  %s7 = scalar_select 0, %s6, %s4
  $region1: #{tpu_custom_call.1} parent=0
    #allocation3 [shape = 'u8[524288]{0}', space=vmem, size = 0x80000, scoped, tag = 'input window, operand 0']
    #allocation4 [shape = 's32[2]{0}', space=sflag, size = 0x8, scoped, tag = 'scoped memory for tpu_custom_call.1']
    #allocation5 [shape = 's32[2]{0}', space=sflag, size = 0x8, scoped, tag = 'scoped memory for tpu_custom_call.1']
    #allocation6 [shape = 'u8[131072]{0}', space=vmem, size = 0x20000, scoped, tag = 'input window, operand 1, single buffered']
    #allocation7 [shape = 's32[1]{0}', space=sflag, size = 0x4, scoped, tag = 'scoped memory for tpu_custom_call.1']
    #allocation8 [shape = 'u8[131072]{0}', space=vmem, size = 0x20000, scoped, tag = 'output window, operand 0']
    %8 = vsyncpa [#allocation4], 0
    %s9 = scalar_lea.sflag [#allocation4], 1
    %10 = vsyncpa %s9, 0
    %11 = vsyncpa [#allocation7], 0
    %12 = vsyncpa [#allocation5], 0
    %s13 = scalar_lea.sflag [#allocation5], 1
    %14 = vsyncpa %s13, 0
    loop: start=0, step=1, limit=4
    $region2: #{tpu_custom_call.1} parent=1 // loop_pre_header
      _
    $region3: #{tpu_custom_call.1} parent=1 // loop_header
      %s16 = sphi 0, %s20
      %p17 = scmp.ge.s32.totalorder %s16, 4
      %s23 = sphi 0, %s35
      %s24 = sphi 0, %s31
      %s25 = sphi 0, %s23
      %s26 = sphi 0, %s24
      %s27 = sphi 0, %s25
      %s28 = sphi 0, %s26
      %s40 = sphi 0, %s42
      %s43 = sphi 0, %s40
      %s44 = sphi 0, %s43
      %s60 = sphi 0, %s44
      %s64 = sphi 0, %s64
      %s66 = sphi 0, %s64
      %s67 = sphi 0, %s66
      %s81 = sphi 0, %s67
      %s85 = sphi 0, %s85
      %s87 = sphi 0, %s85
      %s88 = sphi 0, %s87
      %s102 = sphi 0, %s88
      %s108 = sphi 0, %s110
      %s111 = sphi 0, %s108
      %s112 = sphi 0, %s111
      %s128 = sphi 0, %s112
    $region4: #{tpu_custom_call.1} parent=1 // loop_header_branch
      %19 = sbr.rel (%p17) target = $region8
    $region5: #{tpu_custom_call.1} parent=1 // loop_body
      %s21 = ssub.s32 %s16, 1
      %s22 = ssub.s32 %s16, 2
      %s29 = sadd.s32 1, %s24
      %p30 = scmp.ge.s32.totalorder %s29, 1
      %s31 = scalar_select %p30, 0, %s29
      %s32 = sadd.s32 1, %s23
      %s33 = scalar_select %p30, %s32, %s23
      %p34 = scmp.ge.s32.totalorder %s33, 2
      %s35 = scalar_select %p34, 0, %s33
      %s36 = ssub.s32 %s23, %s35
      %s37 = ssub.s32 %s24, %s31
      %s38 = sor.u32 %s36, %s37
      %p39 = scmp.eq.s32.totalorder %s38, 0
      %s41 = sadd.s32 %s40, 1
      %s42 = scalar_select %p39, %s40, %s41
      %p45 = pneg %p39
      %p46 = scmp.eq.s32.totalorder %s16, 1
      %p47 = por %p45, %p46
      %p48 = scmp.ne.s32.totalorder %s40, %s43
      %p49 = scmp.eq.s32.totalorder %s16, 0
      %p50 = por %p48, %p49
      %p51 = scmp.ne.s32.totalorder %s40, %s43
      %p52 = scmp.eq.s32.totalorder %s21, 1
      %p53 = por %p51, %p52
      %p54 = scmp.ne.s32.totalorder %s43, %s44
      %p55 = scmp.eq.s32.totalorder %s21, 0
      %p56 = por %p54, %p55
      %p57 = scmp.ne.s32.totalorder %s43, %s44
      %p58 = scmp.eq.s32.totalorder %s22, 1
      %p59 = por %p57, %p58
      %p61 = scmp.ne.s32.totalorder %s44, %s60
      %p62 = scmp.eq.s32.totalorder %s22, 0
      %p63 = por %p61, %p62
      %s65 = sadd.s32 %s64, 1
      %p68 = scmp.eq.s32.totalorder %s16, 1
      %p69 = scmp.ne.s32.totalorder %s64, %s66
      %p70 = scmp.eq.s32.totalorder %s16, 0
      %p71 = por %p69, %p70
      %p72 = scmp.ne.s32.totalorder %s64, %s66
      %p73 = scmp.eq.s32.totalorder %s21, 1
      %p74 = por %p72, %p73
      %p75 = scmp.ne.s32.totalorder %s66, %s67
      %p76 = scmp.eq.s32.totalorder %s21, 0
      %p77 = por %p75, %p76
      %p78 = scmp.ne.s32.totalorder %s66, %s67
      %p79 = scmp.eq.s32.totalorder %s22, 1
      %p80 = por %p78, %p79
      %p82 = scmp.ne.s32.totalorder %s67, %s81
      %p83 = scmp.eq.s32.totalorder %s22, 0
      %p84 = por %p82, %p83
      %s86 = sadd.s32 %s85, 1
      %p89 = scmp.eq.s32.totalorder %s16, 1
      %p90 = scmp.ne.s32.totalorder %s85, %s87
      %p91 = scmp.eq.s32.totalorder %s16, 0
      %p92 = por %p90, %p91
      %p93 = scmp.ne.s32.totalorder %s85, %s87
      %p94 = scmp.eq.s32.totalorder %s21, 1
      %p95 = por %p93, %p94
      %p96 = scmp.ne.s32.totalorder %s87, %s88
      %p97 = scmp.eq.s32.totalorder %s21, 0
      %p98 = por %p96, %p97
      %p99 = scmp.ne.s32.totalorder %s87, %s88
      %p100 = scmp.eq.s32.totalorder %s22, 1
      %p101 = por %p99, %p100
      %p103 = scmp.ne.s32.totalorder %s88, %s102
      %p104 = scmp.eq.s32.totalorder %s22, 0
      %p105 = por %p103, %p104
      %s106 = ssub.s32 %s23, %s35
      %p107 = scmp.eq.s32.totalorder %s106, 0
      %s109 = sadd.s32 %s108, 1
      %s110 = scalar_select %p107, %s108, %s109
      %p113 = pneg %p107
      %p114 = scmp.eq.s32.totalorder %s16, 1
      %p115 = por %p113, %p114
      %p116 = scmp.ne.s32.totalorder %s108, %s111
      %p117 = scmp.eq.s32.totalorder %s16, 0
      %p118 = por %p116, %p117
      %p119 = scmp.ne.s32.totalorder %s108, %s111
      %p120 = scmp.eq.s32.totalorder %s21, 1
      %p121 = por %p119, %p120
      %p122 = scmp.ne.s32.totalorder %s111, %s112
      %p123 = scmp.eq.s32.totalorder %s21, 0
      %p124 = por %p122, %p123
      %p125 = scmp.ne.s32.totalorder %s111, %s112
      %p126 = scmp.eq.s32.totalorder %s22, 1
      %p127 = por %p125, %p126
      %p129 = scmp.ne.s32.totalorder %s112, %s128
      %p130 = scmp.eq.s32.totalorder %s22, 0
      %p131 = por %p129, %p130
      %p132 = scmp.le.s32.totalorder 1, %s16
      %p133 = scmp.lt.s32.totalorder %s16, 3
      %p134 = pnand %p132, %p133
      %p135 = pneg %p134
      // Predicated region
      $region9: #{tpu_custom_call.1} parent=5 // pred_check
        _
      $region10: #{tpu_custom_call.1} parent=5 // pred_check_branch
        %137 = sbr.rel (%p134) target = $region12
      $region11: #{tpu_custom_call.1} parent=5 // pred_region
        %s138 = ssub.s32 %s16, 1
        // Predicated region
        $region13: #{tpu_custom_call.1} parent=11 // pred_check
          %p139 = pneg %p77
        $region14: #{tpu_custom_call.1} parent=11 // pred_check_branch
          %141 = sbr.rel (%p139) target = $region16
        $region15: #{tpu_custom_call.1} parent=11 // pred_region
          %143 = vsyncadd [#allocation7], 0
          %s144 = sshll.u32 %s1, 4
          %s145 = int_to_ptr.hbm [resolvable:$true] %s144
          %s146 = sshll.u32 [#allocation6], 4
          %s147 = int_to_ptr.vmem [resolvable:$true] %s146
          %152 = dma.hbm_to_vmem [thread:$0]  %s145, 4096, %s147, [#allocation7], 64, 64, 4
        $region16: #{tpu_custom_call.1} parent=11 // pred_fallthru
          _
        // Predicated region
        $region17: #{tpu_custom_call.1} parent=11 // pred_check
          %p153 = pneg %p98
        $region18: #{tpu_custom_call.1} parent=11 // pred_check_branch
          %155 = sbr.rel (%p153) target = $region20
        $region19: #{tpu_custom_call.1} parent=11 // pred_region
          _
        $region20: #{tpu_custom_call.1} parent=11 // pred_fallthru
          _
      $region12: #{tpu_custom_call.1} parent=5 // pred_fallthru
        _
      %p156 = scmp.lt.s32.totalorder %s16, 2
      // Predicated region
      $region21: #{tpu_custom_call.1} parent=5 // pred_check
        %p157 = pneg %p156
      $region22: #{tpu_custom_call.1} parent=5 // pred_check_branch
        %159 = sbr.rel (%p157) target = $region24
      $region23: #{tpu_custom_call.1} parent=5 // pred_region
        // Predicated region
        $region25: #{tpu_custom_call.1} parent=23 // pred_check
          %p160 = pneg %p50
        $region26: #{tpu_custom_call.1} parent=23 // pred_check_branch
          %162 = sbr.rel (%p160) target = $region28
        $region27: #{tpu_custom_call.1} parent=23 // pred_region
          %s163 = sand.u32 %s40, 1
          %s164 = scalar_lea.sflag [#allocation4], %s163
          %s165 = sand.u32 %s40, 1
          %s166 = smul.addr %s165, 512
          %s167 = scalar_lea.vmem [#allocation3], %s166
          %s168 = smul.u32 32, %s23
          %s169 = smul.u32 4, %s24
          %171 = vsyncadd %s164, 0
          %s172 = smul.addr %s168, 4
          %s173 = sadd.s32 %s169, %s172
          %s174 = smul.addr %s173, 4
          %s175 = scalar_lea.hbm %s0, %s174
          %s176 = sshll.u32 %s175, 4
          %s177 = int_to_ptr.hbm [resolvable:$true] %s176
          %s178 = sshll.u32 %s167, 4
          %s179 = int_to_ptr.vmem [resolvable:$true] %s178
          %184 = dma.hbm_to_vmem [thread:$0]  %s177, 8192, %s179, %s164, 256, 256, 16
        $region28: #{tpu_custom_call.1} parent=23 // pred_fallthru
          _
      $region24: #{tpu_custom_call.1} parent=5 // pred_fallthru
        _
      %p185 = scmp.le.s32.totalorder 1, %s16
      %p186 = scmp.lt.s32.totalorder %s16, 3
      %p187 = pnand %p185, %p186
      %p188 = pneg %p187
      // Predicated region
      $region29: #{tpu_custom_call.1} parent=5 // pred_check
        _
      $region30: #{tpu_custom_call.1} parent=5 // pred_check_branch
        %190 = sbr.rel (%p187) target = $region32
      $region31: #{tpu_custom_call.1} parent=5 // pred_region
        %s191 = ssub.s32 %s16, 1
        %s192 = sand.u32 %s43, 1
        %s193 = scalar_lea.sflag [#allocation4], %s192
        %s194 = sand.u32 %s43, 1
        %s195 = smul.addr %s194, 512
        %s196 = scalar_lea.vmem [#allocation3], %s195
        // Predicated region
        $region33: #{tpu_custom_call.1} parent=31 // pred_check
          %p197 = pneg %p56
        $region34: #{tpu_custom_call.1} parent=31 // pred_check_branch
          %199 = sbr.rel (%p197) target = $region36
        $region35: #{tpu_custom_call.1} parent=31 // pred_region
          %201 = dma.done %s193, 8192
        $region36: #{tpu_custom_call.1} parent=31 // pred_fallthru
          _
        // Predicated region
        $region37: #{tpu_custom_call.1} parent=31 // pred_check
          %p202 = pneg %p77
        $region38: #{tpu_custom_call.1} parent=31 // pred_check_branch
          %204 = sbr.rel (%p202) target = $region40
        $region39: #{tpu_custom_call.1} parent=31 // pred_region
          %206 = dma.done [#allocation7], 4096
        $region40: #{tpu_custom_call.1} parent=31 // pred_fallthru
          _
        %s207 = sand.u32 %s43, 1
        %s208 = scalar_lea.sflag [#allocation4], %s207
        %s209 = sand.u32 %s43, 1
        %s210 = smul.addr %s209, 512
        %s211 = scalar_lea.vmem [#allocation3], %s210
        %p212 = pneg %p56
        %p213 = pneg %p53
        %p214 = pneg %p77
        %p215 = pneg %p74
        %p216 = pneg %p98
        %p217 = pneg %p95
        %p218 = pneg %p124
        %p219 = pneg %p121
        %s220 = sand.u32 %s111, 1
        %s221 = scalar_lea.sflag [#allocation5], %s220
        %s222 = sand.u32 %s111, 1
        %s223 = smul.addr %s222, 128
        %s224 = scalar_lea.vmem [#allocation8], %s223
        %s225 = smul.u32 32, %s25
        %s226 = smul.u32 4, %s26
        %s227 = smul.u32 32, %s25
        %p228 = scmp.eq.s32.totalorder %s26, 0
        // Predicated region
        $region41: #{tpu_custom_call.1} parent=31 // pred_check
          %p229 = pneg %p228
        $region42: #{tpu_custom_call.1} parent=31 // pred_check_branch
          %231 = sbr.rel (%p229) target = $region44
        $region43: #{tpu_custom_call.1} parent=31 // pred_region
          %232 = vst [vmem:[#allocation2] sm:$0xff] 0.0
          %233 = vst [vmem:[#allocation2 + $0x8] sm:$0xff] 0.0
          %234 = vst [vmem:[#allocation2 + $0x10] sm:$0xff] 0.0
          %235 = vst [vmem:[#allocation2 + $0x18] sm:$0xff] 0.0
          %236 = vst [vmem:[#allocation2 + $0x20] sm:$0xff] 0.0
          %237 = vst [vmem:[#allocation2 + $0x28] sm:$0xff] 0.0
          %238 = vst [vmem:[#allocation2 + $0x30] sm:$0xff] 0.0
          %239 = vst [vmem:[#allocation2 + $0x38] sm:$0xff] 0.0
          %240 = vst [vmem:[#allocation2 + $0x40] sm:$0xff] 0.0
          %241 = vst [vmem:[#allocation2 + $0x48] sm:$0xff] 0.0
          %242 = vst [vmem:[#allocation2 + $0x50] sm:$0xff] 0.0
          %243 = vst [vmem:[#allocation2 + $0x58] sm:$0xff] 0.0
          %244 = vst [vmem:[#allocation2 + $0x60] sm:$0xff] 0.0
          %245 = vst [vmem:[#allocation2 + $0x68] sm:$0xff] 0.0
          %246 = vst [vmem:[#allocation2 + $0x70] sm:$0xff] 0.0
          %247 = vst [vmem:[#allocation2 + $0x78] sm:$0xff] 0.0
          %248 = vst [vmem:[#allocation2 + $0x80] sm:$0xff] 0.0
          %249 = vst [vmem:[#allocation2 + $0x88] sm:$0xff] 0.0
          %250 = vst [vmem:[#allocation2 + $0x90] sm:$0xff] 0.0
          %251 = vst [vmem:[#allocation2 + $0x98] sm:$0xff] 0.0
          %252 = vst [vmem:[#allocation2 + $0xa0] sm:$0xff] 0.0
          %253 = vst [vmem:[#allocation2 + $0xa8] sm:$0xff] 0.0
          %254 = vst [vmem:[#allocation2 + $0xb0] sm:$0xff] 0.0
          %255 = vst [vmem:[#allocation2 + $0xb8] sm:$0xff] 0.0
          %256 = vst [vmem:[#allocation2 + $0xc0] sm:$0xff] 0.0
          %257 = vst [vmem:[#allocation2 + $0xc8] sm:$0xff] 0.0
          %258 = vst [vmem:[#allocation2 + $0xd0] sm:$0xff] 0.0
          %259 = vst [vmem:[#allocation2 + $0xd8] sm:$0xff] 0.0
          %260 = vst [vmem:[#allocation2 + $0xe0] sm:$0xff] 0.0
          %261 = vst [vmem:[#allocation2 + $0xe8] sm:$0xff] 0.0
          %262 = vst [vmem:[#allocation2 + $0xf0] sm:$0xff] 0.0
          %263 = vst [vmem:[#allocation2 + $0xf8] sm:$0xff] 0.0
        $region44: #{tpu_custom_call.1} parent=31 // pred_fallthru
          _
        %s264 = smul.u32 %s26, 512
        %s265 = sshra.s32 %s264, 3
        %s266 = sand.u32 %s264, 7
        %s267 = smul.addr %s265, 4
        %s268 = scalar_lea.vmem [#allocation6], %s267
        %v269 = vld [vmem:[%s268] sm:$0xf]
        %v270 = vld [vmem:[%s268 + $0x4] sm:$0xf]
        %v271 = vld [vmem:[%s268 + $0x8] sm:$0xf]
        %v272 = vld [vmem:[%s268 + $0xc] sm:$0xf]
        %v273 = vld [vmem:[%s268 + $0x10] sm:$0xf]
        %v274 = vld [vmem:[%s268 + $0x14] sm:$0xf]
        %v275 = vld [vmem:[%s268 + $0x18] sm:$0xf]
        %v276 = vld [vmem:[%s268 + $0x1c] sm:$0xf]
        %v277 = vld [vmem:[%s268 + $0x20] sm:$0xf]
        %v278 = vld [vmem:[%s268 + $0x24] sm:$0xf]
        %v279 = vld [vmem:[%s268 + $0x28] sm:$0xf]
        %v280 = vld [vmem:[%s268 + $0x2c] sm:$0xf]
        %v281 = vld [vmem:[%s268 + $0x30] sm:$0xf]
        %v282 = vld [vmem:[%s268 + $0x34] sm:$0xf]
        %v283 = vld [vmem:[%s268 + $0x38] sm:$0xf]
        %v284 = vld [vmem:[%s268 + $0x3c] sm:$0xf]
        %v285 = vld [vmem:[%s268 + $0x40] sm:$0xf]
        %v286 = vld [vmem:[%s268 + $0x44] sm:$0xf]
        %v287 = vld [vmem:[%s268 + $0x48] sm:$0xf]
        %v288 = vld [vmem:[%s268 + $0x4c] sm:$0xf]
        %v289 = vld [vmem:[%s268 + $0x50] sm:$0xf]
        %v290 = vld [vmem:[%s268 + $0x54] sm:$0xf]
        %v291 = vld [vmem:[%s268 + $0x58] sm:$0xf]
        %v292 = vld [vmem:[%s268 + $0x5c] sm:$0xf]
        %v293 = vld [vmem:[%s268 + $0x60] sm:$0xf]
        %v294 = vld [vmem:[%s268 + $0x64] sm:$0xf]
        %v295 = vld [vmem:[%s268 + $0x68] sm:$0xf]
        %v296 = vld [vmem:[%s268 + $0x6c] sm:$0xf]
        %v297 = vld [vmem:[%s268 + $0x70] sm:$0xf]
        %v298 = vld [vmem:[%s268 + $0x74] sm:$0xf]
        %v299 = vld [vmem:[%s268 + $0x78] sm:$0xf]
        %v300 = vld [vmem:[%s268 + $0x7c] sm:$0xf]
        %v301 = vld [vmem:[%s268 + $0x80] sm:$0xf]
        %v302 = vld [vmem:[%s268 + $0x84] sm:$0xf]
        %v303 = vld [vmem:[%s268 + $0x88] sm:$0xf]
        %v304 = vld [vmem:[%s268 + $0x8c] sm:$0xf]
        %v305 = vld [vmem:[%s268 + $0x90] sm:$0xf]
        %v306 = vld [vmem:[%s268 + $0x94] sm:$0xf]
        %v307 = vld [vmem:[%s268 + $0x98] sm:$0xf]
        %v308 = vld [vmem:[%s268 + $0x9c] sm:$0xf]
        %v309 = vld [vmem:[%s268 + $0xa0] sm:$0xf]
        %v310 = vld [vmem:[%s268 + $0xa4] sm:$0xf]
        %v311 = vld [vmem:[%s268 + $0xa8] sm:$0xf]
        %v312 = vld [vmem:[%s268 + $0xac] sm:$0xf]
        %v313 = vld [vmem:[%s268 + $0xb0] sm:$0xf]
        %v314 = vld [vmem:[%s268 + $0xb4] sm:$0xf]
        %v315 = vld [vmem:[%s268 + $0xb8] sm:$0xf]
        %v316 = vld [vmem:[%s268 + $0xbc] sm:$0xf]
        %v317 = vld [vmem:[%s268 + $0xc0] sm:$0xf]
        %v318 = vld [vmem:[%s268 + $0xc4] sm:$0xf]
        %v319 = vld [vmem:[%s268 + $0xc8] sm:$0xf]
        %v320 = vld [vmem:[%s268 + $0xcc] sm:$0xf]
        %v321 = vld [vmem:[%s268 + $0xd0] sm:$0xf]
        %v322 = vld [vmem:[%s268 + $0xd4] sm:$0xf]
        %v323 = vld [vmem:[%s268 + $0xd8] sm:$0xf]
        %v324 = vld [vmem:[%s268 + $0xdc] sm:$0xf]
        %v325 = vld [vmem:[%s268 + $0xe0] sm:$0xf]
        %v326 = vld [vmem:[%s268 + $0xe4] sm:$0xf]
        %v327 = vld [vmem:[%s268 + $0xe8] sm:$0xf]
        %v328 = vld [vmem:[%s268 + $0xec] sm:$0xf]
        %v329 = vld [vmem:[%s268 + $0xf0] sm:$0xf]
        %v330 = vld [vmem:[%s268 + $0xf4] sm:$0xf]
        %v331 = vld [vmem:[%s268 + $0xf8] sm:$0xf]
        %v332 = vld [vmem:[%s268 + $0xfc] sm:$0xf]
        %v333 = vld [vmem:[#allocation2] sm:$0xff]
        %v334 = vld [vmem:[#allocation2 + $0x8] sm:$0xff]
        %v335 = vld [vmem:[#allocation2 + $0x10] sm:$0xff]
        %v336 = vld [vmem:[#allocation2 + $0x18] sm:$0xff]
        %v337 = vld [vmem:[#allocation2 + $0x20] sm:$0xff]
        %v338 = vld [vmem:[#allocation2 + $0x28] sm:$0xff]
        %v339 = vld [vmem:[#allocation2 + $0x30] sm:$0xff]
        %v340 = vld [vmem:[#allocation2 + $0x38] sm:$0xff]
        %v341 = vld [vmem:[#allocation2 + $0x40] sm:$0xff]
        %v342 = vld [vmem:[#allocation2 + $0x48] sm:$0xff]
        %v343 = vld [vmem:[#allocation2 + $0x50] sm:$0xff]
        %v344 = vld [vmem:[#allocation2 + $0x58] sm:$0xff]
        %v345 = vld [vmem:[#allocation2 + $0x60] sm:$0xff]
        %v346 = vld [vmem:[#allocation2 + $0x68] sm:$0xff]
        %v347 = vld [vmem:[#allocation2 + $0x70] sm:$0xff]
        %v348 = vld [vmem:[#allocation2 + $0x78] sm:$0xff]
        %v349 = vld [vmem:[#allocation2 + $0x80] sm:$0xff]
        %v350 = vld [vmem:[#allocation2 + $0x88] sm:$0xff]
        %v351 = vld [vmem:[#allocation2 + $0x90] sm:$0xff]
        %v352 = vld [vmem:[#allocation2 + $0x98] sm:$0xff]
        %v353 = vld [vmem:[#allocation2 + $0xa0] sm:$0xff]
        %v354 = vld [vmem:[#allocation2 + $0xa8] sm:$0xff]
        %v355 = vld [vmem:[#allocation2 + $0xb0] sm:$0xff]
        %v356 = vld [vmem:[#allocation2 + $0xb8] sm:$0xff]
        %v357 = vld [vmem:[#allocation2 + $0xc0] sm:$0xff]
        %v358 = vld [vmem:[#allocation2 + $0xc8] sm:$0xff]
        %v359 = vld [vmem:[#allocation2 + $0xd0] sm:$0xff]
        %v360 = vld [vmem:[#allocation2 + $0xd8] sm:$0xff]
        %v361 = vld [vmem:[#allocation2 + $0xe0] sm:$0xff]
        %v362 = vld [vmem:[#allocation2 + $0xe8] sm:$0xff]
        %v363 = vld [vmem:[#allocation2 + $0xf0] sm:$0xff]
        %v364 = vld [vmem:[#allocation2 + $0xf8] sm:$0xff]
        %v365 = vld [vmem:[%s196] sm:$0xff]
        %v366 = vld [vmem:[%s196 + $0x8] sm:$0xff]
        %v367 = vld [vmem:[%s196 + $0x10] sm:$0xff]
        %v368 = vld [vmem:[%s196 + $0x18] sm:$0xff]
        %v369 = vld [vmem:[%s196 + $0x20] sm:$0xff]
        %v370 = vld [vmem:[%s196 + $0x28] sm:$0xff]
        %v371 = vld [vmem:[%s196 + $0x30] sm:$0xff]
        %v372 = vld [vmem:[%s196 + $0x38] sm:$0xff]
        %v373 = vld [vmem:[%s196 + $0x40] sm:$0xff]
        %v374 = vld [vmem:[%s196 + $0x48] sm:$0xff]
        %v375 = vld [vmem:[%s196 + $0x50] sm:$0xff]
        %v376 = vld [vmem:[%s196 + $0x58] sm:$0xff]
        %v377 = vld [vmem:[%s196 + $0x60] sm:$0xff]
        %v378 = vld [vmem:[%s196 + $0x68] sm:$0xff]
        %v379 = vld [vmem:[%s196 + $0x70] sm:$0xff]
        %v380 = vld [vmem:[%s196 + $0x78] sm:$0xff]
        %v381 = vld [vmem:[%s196 + $0x80] sm:$0xff]
        %v382 = vld [vmem:[%s196 + $0x88] sm:$0xff]
        %v383 = vld [vmem:[%s196 + $0x90] sm:$0xff]
        %v384 = vld [vmem:[%s196 + $0x98] sm:$0xff]
        %v385 = vld [vmem:[%s196 + $0xa0] sm:$0xff]
        %v386 = vld [vmem:[%s196 + $0xa8] sm:$0xff]
        %v387 = vld [vmem:[%s196 + $0xb0] sm:$0xff]
        %v388 = vld [vmem:[%s196 + $0xb8] sm:$0xff]
        %v389 = vld [vmem:[%s196 + $0xc0] sm:$0xff]
        %v390 = vld [vmem:[%s196 + $0xc8] sm:$0xff]
        %v391 = vld [vmem:[%s196 + $0xd0] sm:$0xff]
        %v392 = vld [vmem:[%s196 + $0xd8] sm:$0xff]
        %v393 = vld [vmem:[%s196 + $0xe0] sm:$0xff]
        %v394 = vld [vmem:[%s196 + $0xe8] sm:$0xff]
        %v395 = vld [vmem:[%s196 + $0xf0] sm:$0xff]
        %v396 = vld [vmem:[%s196 + $0xf8] sm:$0xff]
        %v397 = vld [vmem:[%s196 + $0x100] sm:$0xff]
        %v398 = vld [vmem:[%s196 + $0x108] sm:$0xff]
        %v399 = vld [vmem:[%s196 + $0x110] sm:$0xff]
        %v400 = vld [vmem:[%s196 + $0x118] sm:$0xff]
        %v401 = vld [vmem:[%s196 + $0x120] sm:$0xff]
        %v402 = vld [vmem:[%s196 + $0x128] sm:$0xff]
        %v403 = vld [vmem:[%s196 + $0x130] sm:$0xff]
        %v404 = vld [vmem:[%s196 + $0x138] sm:$0xff]
        %v405 = vld [vmem:[%s196 + $0x140] sm:$0xff]
        %v406 = vld [vmem:[%s196 + $0x148] sm:$0xff]
        %v407 = vld [vmem:[%s196 + $0x150] sm:$0xff]
        %v408 = vld [vmem:[%s196 + $0x158] sm:$0xff]
        %v409 = vld [vmem:[%s196 + $0x160] sm:$0xff]
        %v410 = vld [vmem:[%s196 + $0x168] sm:$0xff]
        %v411 = vld [vmem:[%s196 + $0x170] sm:$0xff]
        %v412 = vld [vmem:[%s196 + $0x178] sm:$0xff]
        %v413 = vld [vmem:[%s196 + $0x180] sm:$0xff]
        %v414 = vld [vmem:[%s196 + $0x188] sm:$0xff]
        %v415 = vld [vmem:[%s196 + $0x190] sm:$0xff]
        %v416 = vld [vmem:[%s196 + $0x198] sm:$0xff]
        %v417 = vld [vmem:[%s196 + $0x1a0] sm:$0xff]
        %v418 = vld [vmem:[%s196 + $0x1a8] sm:$0xff]
        %v419 = vld [vmem:[%s196 + $0x1b0] sm:$0xff]
        %v420 = vld [vmem:[%s196 + $0x1b8] sm:$0xff]
        %v421 = vld [vmem:[%s196 + $0x1c0] sm:$0xff]
        %v422 = vld [vmem:[%s196 + $0x1c8] sm:$0xff]
        %v423 = vld [vmem:[%s196 + $0x1d0] sm:$0xff]
        %v424 = vld [vmem:[%s196 + $0x1d8] sm:$0xff]
        %v425 = vld [vmem:[%s196 + $0x1e0] sm:$0xff]
        %v426 = vld [vmem:[%s196 + $0x1e8] sm:$0xff]
        %v427 = vld [vmem:[%s196 + $0x1f0] sm:$0xff]
        %v428 = vld [vmem:[%s196 + $0x1f8] sm:$0xff]
        %v493 = vunpack.c.l.b16 %v365
        %v494 = vunpack.c.h.b16 %v365
        %v495 = vunpack.c.l.b16 %v366
        %v496 = vunpack.c.h.b16 %v366
        %v497 = vunpack.c.l.b16 %v367
        %v498 = vunpack.c.h.b16 %v367
        %v499 = vunpack.c.l.b16 %v368
        %v500 = vunpack.c.h.b16 %v368
        %v501 = vunpack.c.l.b16 %v369
        %v502 = vunpack.c.h.b16 %v369
        %v503 = vunpack.c.l.b16 %v370
        %v504 = vunpack.c.h.b16 %v370
        %v505 = vunpack.c.l.b16 %v371
        %v506 = vunpack.c.h.b16 %v371
        %v507 = vunpack.c.l.b16 %v372
        %v508 = vunpack.c.h.b16 %v372
        %v509 = vunpack.c.l.b16 %v373
        %v510 = vunpack.c.h.b16 %v373
        %v511 = vunpack.c.l.b16 %v374
        %v512 = vunpack.c.h.b16 %v374
        %v513 = vunpack.c.l.b16 %v375
        %v514 = vunpack.c.h.b16 %v375
        %v515 = vunpack.c.l.b16 %v376
        %v516 = vunpack.c.h.b16 %v376
        %v517 = vunpack.c.l.b16 %v377
        %v518 = vunpack.c.h.b16 %v377
        %v519 = vunpack.c.l.b16 %v378
        %v520 = vunpack.c.h.b16 %v378
        %v521 = vunpack.c.l.b16 %v379
        %v522 = vunpack.c.h.b16 %v379
        %v523 = vunpack.c.l.b16 %v380
        %v524 = vunpack.c.h.b16 %v380
        %v525 = vunpack.c.l.b16 %v381
        %v526 = vunpack.c.h.b16 %v381
        %v527 = vunpack.c.l.b16 %v382
        %v528 = vunpack.c.h.b16 %v382
        %v529 = vunpack.c.l.b16 %v383
        %v530 = vunpack.c.h.b16 %v383
        %v531 = vunpack.c.l.b16 %v384
        %v532 = vunpack.c.h.b16 %v384
        %v533 = vunpack.c.l.b16 %v385
        %v534 = vunpack.c.h.b16 %v385
        %v535 = vunpack.c.l.b16 %v386
        %v536 = vunpack.c.h.b16 %v386
        %v537 = vunpack.c.l.b16 %v387
        %v538 = vunpack.c.h.b16 %v387
        %v539 = vunpack.c.l.b16 %v388
        %v540 = vunpack.c.h.b16 %v388
        %v541 = vunpack.c.l.b16 %v389
        %v542 = vunpack.c.h.b16 %v389
        %v543 = vunpack.c.l.b16 %v390
        %v544 = vunpack.c.h.b16 %v390
        %v545 = vunpack.c.l.b16 %v391
        %v546 = vunpack.c.h.b16 %v391
        %v547 = vunpack.c.l.b16 %v392
        %v548 = vunpack.c.h.b16 %v392
        %v549 = vunpack.c.l.b16 %v393
        %v550 = vunpack.c.h.b16 %v393
        %v551 = vunpack.c.l.b16 %v394
        %v552 = vunpack.c.h.b16 %v394
        %v553 = vunpack.c.l.b16 %v395
        %v554 = vunpack.c.h.b16 %v395
        %v555 = vunpack.c.l.b16 %v396
        %v556 = vunpack.c.h.b16 %v396
        %v557 = vunpack.c.l.b16 %v397
        %v558 = vunpack.c.h.b16 %v397
        %v559 = vunpack.c.l.b16 %v398
        %v560 = vunpack.c.h.b16 %v398
        %v561 = vunpack.c.l.b16 %v399
        %v562 = vunpack.c.h.b16 %v399
        %v563 = vunpack.c.l.b16 %v400
        %v564 = vunpack.c.h.b16 %v400
        %v565 = vunpack.c.l.b16 %v401
        %v566 = vunpack.c.h.b16 %v401
        %v567 = vunpack.c.l.b16 %v402
        %v568 = vunpack.c.h.b16 %v402
        %v569 = vunpack.c.l.b16 %v403
        %v570 = vunpack.c.h.b16 %v403
        %v571 = vunpack.c.l.b16 %v404
        %v572 = vunpack.c.h.b16 %v404
        %v573 = vunpack.c.l.b16 %v405
        %v574 = vunpack.c.h.b16 %v405
        %v575 = vunpack.c.l.b16 %v406
        %v576 = vunpack.c.h.b16 %v406
        %v577 = vunpack.c.l.b16 %v407
        %v578 = vunpack.c.h.b16 %v407
        %v579 = vunpack.c.l.b16 %v408
        %v580 = vunpack.c.h.b16 %v408
        %v581 = vunpack.c.l.b16 %v409
        %v582 = vunpack.c.h.b16 %v409
        %v583 = vunpack.c.l.b16 %v410
        %v584 = vunpack.c.h.b16 %v410
        %v585 = vunpack.c.l.b16 %v411
        %v586 = vunpack.c.h.b16 %v411
        %v587 = vunpack.c.l.b16 %v412
        %v588 = vunpack.c.h.b16 %v412
        %v589 = vunpack.c.l.b16 %v413
        %v590 = vunpack.c.h.b16 %v413
        %v591 = vunpack.c.l.b16 %v414
        %v592 = vunpack.c.h.b16 %v414
        %v593 = vunpack.c.l.b16 %v415
        %v594 = vunpack.c.h.b16 %v415
        %v595 = vunpack.c.l.b16 %v416
        %v596 = vunpack.c.h.b16 %v416
        %v597 = vunpack.c.l.b16 %v417
        %v598 = vunpack.c.h.b16 %v417
        %v599 = vunpack.c.l.b16 %v418
        %v600 = vunpack.c.h.b16 %v418
        %v601 = vunpack.c.l.b16 %v419
        %v602 = vunpack.c.h.b16 %v419
        %v603 = vunpack.c.l.b16 %v420
        %v604 = vunpack.c.h.b16 %v420
        %v605 = vunpack.c.l.b16 %v421
        %v606 = vunpack.c.h.b16 %v421
        %v607 = vunpack.c.l.b16 %v422
        %v608 = vunpack.c.h.b16 %v422
        %v609 = vunpack.c.l.b16 %v423
        %v610 = vunpack.c.h.b16 %v423
        %v611 = vunpack.c.l.b16 %v424
        %v612 = vunpack.c.h.b16 %v424
        %v613 = vunpack.c.l.b16 %v425
        %v614 = vunpack.c.h.b16 %v425
        %v615 = vunpack.c.l.b16 %v426
        %v616 = vunpack.c.h.b16 %v426
        %v617 = vunpack.c.l.b16 %v427
        %v618 = vunpack.c.h.b16 %v427
        %v619 = vunpack.c.l.b16 %v428
        %v620 = vunpack.c.h.b16 %v428
        %v621 = vpack.c.b16 %v497, %v493
        %v622 = vpack.c.b16 %v498, %v494
        %v623 = vpack.c.b16 %v499, %v495
        %v624 = vpack.c.b16 %v500, %v496
        %v625 = vpack.c.b16 %v505, %v501
        %v626 = vpack.c.b16 %v506, %v502
        %v627 = vpack.c.b16 %v507, %v503
        %v628 = vpack.c.b16 %v508, %v504
        %v629 = vpack.c.b16 %v513, %v509
        %v630 = vpack.c.b16 %v514, %v510
        %v631 = vpack.c.b16 %v515, %v511
        %v632 = vpack.c.b16 %v516, %v512
        %v633 = vpack.c.b16 %v521, %v517
        %v634 = vpack.c.b16 %v522, %v518
        %v635 = vpack.c.b16 %v523, %v519
        %v636 = vpack.c.b16 %v524, %v520
        %v637 = vpack.c.b16 %v529, %v525
        %v638 = vpack.c.b16 %v530, %v526
        %v639 = vpack.c.b16 %v531, %v527
        %v640 = vpack.c.b16 %v532, %v528
        %v641 = vpack.c.b16 %v537, %v533
        %v642 = vpack.c.b16 %v538, %v534
        %v643 = vpack.c.b16 %v539, %v535
        %v644 = vpack.c.b16 %v540, %v536
        %v645 = vpack.c.b16 %v545, %v541
        %v646 = vpack.c.b16 %v546, %v542
        %v647 = vpack.c.b16 %v547, %v543
        %v648 = vpack.c.b16 %v548, %v544
        %v649 = vpack.c.b16 %v553, %v549
        %v650 = vpack.c.b16 %v554, %v550
        %v651 = vpack.c.b16 %v555, %v551
        %v652 = vpack.c.b16 %v556, %v552
        %v653 = vpack.c.b16 %v561, %v557
        %v654 = vpack.c.b16 %v562, %v558
        %v655 = vpack.c.b16 %v563, %v559
        %v656 = vpack.c.b16 %v564, %v560
        %v657 = vpack.c.b16 %v569, %v565
        %v658 = vpack.c.b16 %v570, %v566
        %v659 = vpack.c.b16 %v571, %v567
        %v660 = vpack.c.b16 %v572, %v568
        %v661 = vpack.c.b16 %v577, %v573
        %v662 = vpack.c.b16 %v578, %v574
        %v663 = vpack.c.b16 %v579, %v575
        %v664 = vpack.c.b16 %v580, %v576
        %v665 = vpack.c.b16 %v585, %v581
        %v666 = vpack.c.b16 %v586, %v582
        %v667 = vpack.c.b16 %v587, %v583
        %v668 = vpack.c.b16 %v588, %v584
        %v669 = vpack.c.b16 %v593, %v589
        %v670 = vpack.c.b16 %v594, %v590
        %v671 = vpack.c.b16 %v595, %v591
        %v672 = vpack.c.b16 %v596, %v592
        %v673 = vpack.c.b16 %v601, %v597
        %v674 = vpack.c.b16 %v602, %v598
        %v675 = vpack.c.b16 %v603, %v599
        %v676 = vpack.c.b16 %v604, %v600
        %v677 = vpack.c.b16 %v609, %v605
        %v678 = vpack.c.b16 %v610, %v606
        %v679 = vpack.c.b16 %v611, %v607
        %v680 = vpack.c.b16 %v612, %v608
        %v681 = vpack.c.b16 %v617, %v613
        %v682 = vpack.c.b16 %v618, %v614
        %v683 = vpack.c.b16 %v619, %v615
        %v684 = vpack.c.b16 %v620, %v616
        %v813 = vunpack.c.l.b16 %v269
        %v814 = vunpack.c.l.b16 %v270
        %v815 = vunpack.c.l.b16 %v271
        %v816 = vunpack.c.l.b16 %v272
        %v817 = vunpack.c.l.b16 %v273
        %v818 = vunpack.c.l.b16 %v274
        %v819 = vunpack.c.l.b16 %v275
        %v820 = vunpack.c.l.b16 %v276
        %v821 = vunpack.c.l.b16 %v277
        %v822 = vunpack.c.l.b16 %v278
        %v823 = vunpack.c.l.b16 %v279
        %v824 = vunpack.c.l.b16 %v280
        %v825 = vunpack.c.l.b16 %v281
        %v826 = vunpack.c.l.b16 %v282
        %v827 = vunpack.c.l.b16 %v283
        %v828 = vunpack.c.l.b16 %v284
        %v829 = vunpack.c.l.b16 %v285
        %v830 = vunpack.c.l.b16 %v286
        %v831 = vunpack.c.l.b16 %v287
        %v832 = vunpack.c.l.b16 %v288
        %v833 = vunpack.c.l.b16 %v289
        %v834 = vunpack.c.l.b16 %v290
        %v835 = vunpack.c.l.b16 %v291
        %v836 = vunpack.c.l.b16 %v292
        %v837 = vunpack.c.l.b16 %v293
        %v838 = vunpack.c.l.b16 %v294
        %v839 = vunpack.c.l.b16 %v295
        %v840 = vunpack.c.l.b16 %v296
        %v841 = vunpack.c.l.b16 %v297
        %v842 = vunpack.c.l.b16 %v298
        %v843 = vunpack.c.l.b16 %v299
        %v844 = vunpack.c.l.b16 %v300
        %v845 = vunpack.c.l.b16 %v301
        %v846 = vunpack.c.l.b16 %v302
        %v847 = vunpack.c.l.b16 %v303
        %v848 = vunpack.c.l.b16 %v304
        %v849 = vunpack.c.l.b16 %v305
        %v850 = vunpack.c.l.b16 %v306
        %v851 = vunpack.c.l.b16 %v307
        %v852 = vunpack.c.l.b16 %v308
        %v853 = vunpack.c.l.b16 %v309
        %v854 = vunpack.c.l.b16 %v310
        %v855 = vunpack.c.l.b16 %v311
        %v856 = vunpack.c.l.b16 %v312
        %v857 = vunpack.c.l.b16 %v313
        %v858 = vunpack.c.l.b16 %v314
        %v859 = vunpack.c.l.b16 %v315
        %v860 = vunpack.c.l.b16 %v316
        %v861 = vunpack.c.l.b16 %v317
        %v862 = vunpack.c.l.b16 %v318
        %v863 = vunpack.c.l.b16 %v319
        %v864 = vunpack.c.l.b16 %v320
        %v865 = vunpack.c.l.b16 %v321
        %v866 = vunpack.c.l.b16 %v322
        %v867 = vunpack.c.l.b16 %v323
        %v868 = vunpack.c.l.b16 %v324
        %v869 = vunpack.c.l.b16 %v325
        %v870 = vunpack.c.l.b16 %v326
        %v871 = vunpack.c.l.b16 %v327
        %v872 = vunpack.c.l.b16 %v328
        %v873 = vunpack.c.l.b16 %v329
        %v874 = vunpack.c.l.b16 %v330
        %v875 = vunpack.c.l.b16 %v331
        %v876 = vunpack.c.l.b16 %v332
        %v877 = vpack.c.b16 %v814, %v813
        %v878 = vpack.c.b16 %v816, %v815
        %v879 = vpack.c.b16 %v818, %v817
        %v880 = vpack.c.b16 %v820, %v819
        %v881 = vpack.c.b16 %v822, %v821
        %v882 = vpack.c.b16 %v824, %v823
        %v883 = vpack.c.b16 %v826, %v825
        %v884 = vpack.c.b16 %v828, %v827
        %v885 = vpack.c.b16 %v830, %v829
        %v886 = vpack.c.b16 %v832, %v831
        %v887 = vpack.c.b16 %v834, %v833
        %v888 = vpack.c.b16 %v836, %v835
        %v889 = vpack.c.b16 %v838, %v837
        %v890 = vpack.c.b16 %v840, %v839
        %v891 = vpack.c.b16 %v842, %v841
        %v892 = vpack.c.b16 %v844, %v843
        %v893 = vpack.c.b16 %v846, %v845
        %v894 = vpack.c.b16 %v848, %v847
        %v895 = vpack.c.b16 %v850, %v849
        %v896 = vpack.c.b16 %v852, %v851
        %v897 = vpack.c.b16 %v854, %v853
        %v898 = vpack.c.b16 %v856, %v855
        %v899 = vpack.c.b16 %v858, %v857
        %v900 = vpack.c.b16 %v860, %v859
        %v901 = vpack.c.b16 %v862, %v861
        %v902 = vpack.c.b16 %v864, %v863
        %v903 = vpack.c.b16 %v866, %v865
        %v904 = vpack.c.b16 %v868, %v867
        %v905 = vpack.c.b16 %v870, %v869
        %v906 = vpack.c.b16 %v872, %v871
        %v907 = vpack.c.b16 %v874, %v873
        %v908 = vpack.c.b16 %v876, %v875
        %941 = vmatpush.bf16.msra.mxu0 %v884
        %942 = vmatpush.bf16.msra.mxu0 %v883
        %943 = vmatpush.bf16.msra.mxu0 %v882
        %944 = vmatpush.bf16.msra.mxu0 %v881
        %945 = vmatpush.bf16.msra.mxu0 %v880
        %946 = vmatpush.bf16.msra.mxu0 %v879
        %947 = vmatpush.bf16.msra.mxu0 %v878
        %948 = vmatpush.bf16.msra.mxu0 %v877
        %949 = vmatmul.bf16.gmra.mxu0 %v621
        %v950 = vpop.f32.mrf.mxu0
        %v951 = vadd.f32 0.0, %v950
        %v952 = vpop.f32.mrf.mxu0
        %v953 = vadd.f32 0.0, %v952
        %954 = vmatmul.bf16.gmra.mxu0 %v625
        %v955 = vpop.f32.mrf.mxu0
        %v956 = vadd.f32 0.0, %v955
        %v957 = vpop.f32.mrf.mxu0
        %v958 = vadd.f32 0.0, %v957
        %959 = vmatmul.bf16.gmra.mxu0 %v629
        %v960 = vpop.f32.mrf.mxu0
        %v961 = vadd.f32 0.0, %v960
        %v962 = vpop.f32.mrf.mxu0
        %v963 = vadd.f32 0.0, %v962
        %964 = vmatmul.bf16.gmra.mxu0 %v633
        %v965 = vpop.f32.mrf.mxu0
        %v966 = vadd.f32 0.0, %v965
        %v967 = vpop.f32.mrf.mxu0
        %v968 = vadd.f32 0.0, %v967
        %969 = vmatmul.bf16.gmra.mxu0 %v637
        %v970 = vpop.f32.mrf.mxu0
        %v971 = vadd.f32 0.0, %v970
        %v972 = vpop.f32.mrf.mxu0
        %v973 = vadd.f32 0.0, %v972
        %974 = vmatmul.bf16.gmra.mxu0 %v641
        %v975 = vpop.f32.mrf.mxu0
        %v976 = vadd.f32 0.0, %v975
        %v977 = vpop.f32.mrf.mxu0
        %v978 = vadd.f32 0.0, %v977
        %979 = vmatmul.bf16.gmra.mxu0 %v645
        %v980 = vpop.f32.mrf.mxu0
        %v981 = vadd.f32 0.0, %v980
        %v982 = vpop.f32.mrf.mxu0
        %v983 = vadd.f32 0.0, %v982
        %984 = vmatmul.bf16.gmra.mxu0 %v649
        %v985 = vpop.f32.mrf.mxu0
        %v986 = vadd.f32 0.0, %v985
        %v987 = vpop.f32.mrf.mxu0
        %v988 = vadd.f32 0.0, %v987
        %989 = vmatmul.bf16.gmra.mxu0 %v653
        %v990 = vpop.f32.mrf.mxu0
        %v991 = vadd.f32 0.0, %v990
        %v992 = vpop.f32.mrf.mxu0
        %v993 = vadd.f32 0.0, %v992
        %994 = vmatmul.bf16.gmra.mxu0 %v657
        %v995 = vpop.f32.mrf.mxu0
        %v996 = vadd.f32 0.0, %v995
        %v997 = vpop.f32.mrf.mxu0
        %v998 = vadd.f32 0.0, %v997
        %999 = vmatmul.bf16.gmra.mxu0 %v661
        %v1000 = vpop.f32.mrf.mxu0
        %v1001 = vadd.f32 0.0, %v1000
        %v1002 = vpop.f32.mrf.mxu0
        %v1003 = vadd.f32 0.0, %v1002
        %1004 = vmatmul.bf16.gmra.mxu0 %v665
        %v1005 = vpop.f32.mrf.mxu0
        %v1006 = vadd.f32 0.0, %v1005
        %v1007 = vpop.f32.mrf.mxu0
        %v1008 = vadd.f32 0.0, %v1007
        %1009 = vmatmul.bf16.gmra.mxu0 %v669
        %v1010 = vpop.f32.mrf.mxu0
        %v1011 = vadd.f32 0.0, %v1010
        %v1012 = vpop.f32.mrf.mxu0
        %v1013 = vadd.f32 0.0, %v1012
        %1014 = vmatmul.bf16.gmra.mxu0 %v673
        %v1015 = vpop.f32.mrf.mxu0
        %v1016 = vadd.f32 0.0, %v1015
        %v1017 = vpop.f32.mrf.mxu0
        %v1018 = vadd.f32 0.0, %v1017
        %1019 = vmatmul.bf16.gmra.mxu0 %v677
        %v1020 = vpop.f32.mrf.mxu0
        %v1021 = vadd.f32 0.0, %v1020
        %v1022 = vpop.f32.mrf.mxu0
        %v1023 = vadd.f32 0.0, %v1022
        %1024 = vmatmul.bf16.gmra.mxu0 %v681
        %v1025 = vpop.f32.mrf.mxu0
        %v1026 = vadd.f32 0.0, %v1025
        %v1027 = vpop.f32.mrf.mxu0
        %v1028 = vadd.f32 0.0, %v1027
        %1029 = vdwg.mxu0
        %1030 = vmatpush.bf16.msra.mxu0 %v892
        %1031 = vmatpush.bf16.msra.mxu0 %v891
        %1032 = vmatpush.bf16.msra.mxu0 %v890
        %1033 = vmatpush.bf16.msra.mxu0 %v889
        %1034 = vmatpush.bf16.msra.mxu0 %v888
        %1035 = vmatpush.bf16.msra.mxu0 %v887
        %1036 = vmatpush.bf16.msra.mxu0 %v886
        %1037 = vmatpush.bf16.msra.mxu0 %v885
        %1038 = vmatmul.bf16.gmra.mxu0 %v622
        %v1039 = vpop.f32.mrf.mxu0
        %v1040 = vadd.f32 %v951, %v1039
        %v1041 = vpop.f32.mrf.mxu0
        %v1042 = vadd.f32 %v953, %v1041
        %1043 = vmatmul.bf16.gmra.mxu0 %v626
        %v1044 = vpop.f32.mrf.mxu0
        %v1045 = vadd.f32 %v956, %v1044
        %v1046 = vpop.f32.mrf.mxu0
        %v1047 = vadd.f32 %v958, %v1046
        %1048 = vmatmul.bf16.gmra.mxu0 %v630
        %v1049 = vpop.f32.mrf.mxu0
        %v1050 = vadd.f32 %v961, %v1049
        %v1051 = vpop.f32.mrf.mxu0
        %v1052 = vadd.f32 %v963, %v1051
        %1053 = vmatmul.bf16.gmra.mxu0 %v634
        %v1054 = vpop.f32.mrf.mxu0
        %v1055 = vadd.f32 %v966, %v1054
        %v1056 = vpop.f32.mrf.mxu0
        %v1057 = vadd.f32 %v968, %v1056
        %1058 = vmatmul.bf16.gmra.mxu0 %v638
        %v1059 = vpop.f32.mrf.mxu0
        %v1060 = vadd.f32 %v971, %v1059
        %v1061 = vpop.f32.mrf.mxu0
        %v1062 = vadd.f32 %v973, %v1061
        %1063 = vmatmul.bf16.gmra.mxu0 %v642
        %v1064 = vpop.f32.mrf.mxu0
        %v1065 = vadd.f32 %v976, %v1064
        %v1066 = vpop.f32.mrf.mxu0
        %v1067 = vadd.f32 %v978, %v1066
        %1068 = vmatmul.bf16.gmra.mxu0 %v646
        %v1069 = vpop.f32.mrf.mxu0
        %v1070 = vadd.f32 %v981, %v1069
        %v1071 = vpop.f32.mrf.mxu0
        %v1072 = vadd.f32 %v983, %v1071
        %1073 = vmatmul.bf16.gmra.mxu0 %v650
        %v1074 = vpop.f32.mrf.mxu0
        %v1075 = vadd.f32 %v986, %v1074
        %v1076 = vpop.f32.mrf.mxu0
        %v1077 = vadd.f32 %v988, %v1076
        %1078 = vmatmul.bf16.gmra.mxu0 %v654
        %v1079 = vpop.f32.mrf.mxu0
        %v1080 = vadd.f32 %v991, %v1079
        %v1081 = vpop.f32.mrf.mxu0
        %v1082 = vadd.f32 %v993, %v1081
        %1083 = vmatmul.bf16.gmra.mxu0 %v658
        %v1084 = vpop.f32.mrf.mxu0
        %v1085 = vadd.f32 %v996, %v1084
        %v1086 = vpop.f32.mrf.mxu0
        %v1087 = vadd.f32 %v998, %v1086
        %1088 = vmatmul.bf16.gmra.mxu0 %v662
        %v1089 = vpop.f32.mrf.mxu0
        %v1090 = vadd.f32 %v1001, %v1089
        %v1091 = vpop.f32.mrf.mxu0
        %v1092 = vadd.f32 %v1003, %v1091
        %1093 = vmatmul.bf16.gmra.mxu0 %v666
        %v1094 = vpop.f32.mrf.mxu0
        %v1095 = vadd.f32 %v1006, %v1094
        %v1096 = vpop.f32.mrf.mxu0
        %v1097 = vadd.f32 %v1008, %v1096
        %1098 = vmatmul.bf16.gmra.mxu0 %v670
        %v1099 = vpop.f32.mrf.mxu0
        %v1100 = vadd.f32 %v1011, %v1099
        %v1101 = vpop.f32.mrf.mxu0
        %v1102 = vadd.f32 %v1013, %v1101
        %1103 = vmatmul.bf16.gmra.mxu0 %v674
        %v1104 = vpop.f32.mrf.mxu0
        %v1105 = vadd.f32 %v1016, %v1104
        %v1106 = vpop.f32.mrf.mxu0
        %v1107 = vadd.f32 %v1018, %v1106
        %1108 = vmatmul.bf16.gmra.mxu0 %v678
        %v1109 = vpop.f32.mrf.mxu0
        %v1110 = vadd.f32 %v1021, %v1109
        %v1111 = vpop.f32.mrf.mxu0
        %v1112 = vadd.f32 %v1023, %v1111
        %1113 = vmatmul.bf16.gmra.mxu0 %v682
        %v1114 = vpop.f32.mrf.mxu0
        %v1115 = vadd.f32 %v1026, %v1114
        %v1116 = vpop.f32.mrf.mxu0
        %v1117 = vadd.f32 %v1028, %v1116
        %1118 = vdwg.mxu0
        %1119 = vmatpush.bf16.msra.mxu0 %v900
        %1120 = vmatpush.bf16.msra.mxu0 %v899
        %1121 = vmatpush.bf16.msra.mxu0 %v898
        %1122 = vmatpush.bf16.msra.mxu0 %v897
        %1123 = vmatpush.bf16.msra.mxu0 %v896
        %1124 = vmatpush.bf16.msra.mxu0 %v895
        %1125 = vmatpush.bf16.msra.mxu0 %v894
        %1126 = vmatpush.bf16.msra.mxu0 %v893
        %1127 = vmatmul.bf16.gmra.mxu0 %v623
        %v1128 = vpop.f32.mrf.mxu0
        %v1129 = vadd.f32 %v1040, %v1128
        %v1130 = vpop.f32.mrf.mxu0
        %v1131 = vadd.f32 %v1042, %v1130
        %1132 = vmatmul.bf16.gmra.mxu0 %v627
        %v1133 = vpop.f32.mrf.mxu0
        %v1134 = vadd.f32 %v1045, %v1133
        %v1135 = vpop.f32.mrf.mxu0
        %v1136 = vadd.f32 %v1047, %v1135
        %1137 = vmatmul.bf16.gmra.mxu0 %v631
        %v1138 = vpop.f32.mrf.mxu0
        %v1139 = vadd.f32 %v1050, %v1138
        %v1140 = vpop.f32.mrf.mxu0
        %v1141 = vadd.f32 %v1052, %v1140
        %1142 = vmatmul.bf16.gmra.mxu0 %v635
        %v1143 = vpop.f32.mrf.mxu0
        %v1144 = vadd.f32 %v1055, %v1143
        %v1145 = vpop.f32.mrf.mxu0
        %v1146 = vadd.f32 %v1057, %v1145
        %1147 = vmatmul.bf16.gmra.mxu0 %v639
        %v1148 = vpop.f32.mrf.mxu0
        %v1149 = vadd.f32 %v1060, %v1148
        %v1150 = vpop.f32.mrf.mxu0
        %v1151 = vadd.f32 %v1062, %v1150
        %1152 = vmatmul.bf16.gmra.mxu0 %v643
        %v1153 = vpop.f32.mrf.mxu0
        %v1154 = vadd.f32 %v1065, %v1153
        %v1155 = vpop.f32.mrf.mxu0
        %v1156 = vadd.f32 %v1067, %v1155
        %1157 = vmatmul.bf16.gmra.mxu0 %v647
        %v1158 = vpop.f32.mrf.mxu0
        %v1159 = vadd.f32 %v1070, %v1158
        %v1160 = vpop.f32.mrf.mxu0
        %v1161 = vadd.f32 %v1072, %v1160
        %1162 = vmatmul.bf16.gmra.mxu0 %v651
        %v1163 = vpop.f32.mrf.mxu0
        %v1164 = vadd.f32 %v1075, %v1163
        %v1165 = vpop.f32.mrf.mxu0
        %v1166 = vadd.f32 %v1077, %v1165
        %1167 = vmatmul.bf16.gmra.mxu0 %v655
        %v1168 = vpop.f32.mrf.mxu0
        %v1169 = vadd.f32 %v1080, %v1168
        %v1170 = vpop.f32.mrf.mxu0
        %v1171 = vadd.f32 %v1082, %v1170
        %1172 = vmatmul.bf16.gmra.mxu0 %v659
        %v1173 = vpop.f32.mrf.mxu0
        %v1174 = vadd.f32 %v1085, %v1173
        %v1175 = vpop.f32.mrf.mxu0
        %v1176 = vadd.f32 %v1087, %v1175
        %1177 = vmatmul.bf16.gmra.mxu0 %v663
        %v1178 = vpop.f32.mrf.mxu0
        %v1179 = vadd.f32 %v1090, %v1178
        %v1180 = vpop.f32.mrf.mxu0
        %v1181 = vadd.f32 %v1092, %v1180
        %1182 = vmatmul.bf16.gmra.mxu0 %v667
        %v1183 = vpop.f32.mrf.mxu0
        %v1184 = vadd.f32 %v1095, %v1183
        %v1185 = vpop.f32.mrf.mxu0
        %v1186 = vadd.f32 %v1097, %v1185
        %1187 = vmatmul.bf16.gmra.mxu0 %v671
        %v1188 = vpop.f32.mrf.mxu0
        %v1189 = vadd.f32 %v1100, %v1188
        %v1190 = vpop.f32.mrf.mxu0
        %v1191 = vadd.f32 %v1102, %v1190
        %1192 = vmatmul.bf16.gmra.mxu0 %v675
        %v1193 = vpop.f32.mrf.mxu0
        %v1194 = vadd.f32 %v1105, %v1193
        %v1195 = vpop.f32.mrf.mxu0
        %v1196 = vadd.f32 %v1107, %v1195
        %1197 = vmatmul.bf16.gmra.mxu0 %v679
        %v1198 = vpop.f32.mrf.mxu0
        %v1199 = vadd.f32 %v1110, %v1198
        %v1200 = vpop.f32.mrf.mxu0
        %v1201 = vadd.f32 %v1112, %v1200
        %1202 = vmatmul.bf16.gmra.mxu0 %v683
        %v1203 = vpop.f32.mrf.mxu0
        %v1204 = vadd.f32 %v1115, %v1203
        %v1205 = vpop.f32.mrf.mxu0
        %v1206 = vadd.f32 %v1117, %v1205
        %1207 = vdwg.mxu0
        %1208 = vmatpush.bf16.msra.mxu0 %v908
        %1209 = vmatpush.bf16.msra.mxu0 %v907
        %1210 = vmatpush.bf16.msra.mxu0 %v906
        %1211 = vmatpush.bf16.msra.mxu0 %v905
        %1212 = vmatpush.bf16.msra.mxu0 %v904
        %1213 = vmatpush.bf16.msra.mxu0 %v903
        %1214 = vmatpush.bf16.msra.mxu0 %v902
        %1215 = vmatpush.bf16.msra.mxu0 %v901
        %1216 = vmatmul.bf16.gmra.mxu0 %v624
        %v1217 = vpop.f32.mrf.mxu0
        %v1218 = vadd.f32 %v1129, %v1217
        %v1219 = vpop.f32.mrf.mxu0
        %v1220 = vadd.f32 %v1131, %v1219
        %1221 = vmatmul.bf16.gmra.mxu0 %v628
        %v1222 = vpop.f32.mrf.mxu0
        %v1223 = vadd.f32 %v1134, %v1222
        %v1224 = vpop.f32.mrf.mxu0
        %v1225 = vadd.f32 %v1136, %v1224
        %1226 = vmatmul.bf16.gmra.mxu0 %v632
        %v1227 = vpop.f32.mrf.mxu0
        %v1228 = vadd.f32 %v1139, %v1227
        %v1229 = vpop.f32.mrf.mxu0
        %v1230 = vadd.f32 %v1141, %v1229
        %1231 = vmatmul.bf16.gmra.mxu0 %v636
        %v1232 = vpop.f32.mrf.mxu0
        %v1233 = vadd.f32 %v1144, %v1232
        %v1234 = vpop.f32.mrf.mxu0
        %v1235 = vadd.f32 %v1146, %v1234
        %1236 = vmatmul.bf16.gmra.mxu0 %v640
        %v1237 = vpop.f32.mrf.mxu0
        %v1238 = vadd.f32 %v1149, %v1237
        %v1239 = vpop.f32.mrf.mxu0
        %v1240 = vadd.f32 %v1151, %v1239
        %1241 = vmatmul.bf16.gmra.mxu0 %v644
        %v1242 = vpop.f32.mrf.mxu0
        %v1243 = vadd.f32 %v1154, %v1242
        %v1244 = vpop.f32.mrf.mxu0
        %v1245 = vadd.f32 %v1156, %v1244
        %1246 = vmatmul.bf16.gmra.mxu0 %v648
        %v1247 = vpop.f32.mrf.mxu0
        %v1248 = vadd.f32 %v1159, %v1247
        %v1249 = vpop.f32.mrf.mxu0
        %v1250 = vadd.f32 %v1161, %v1249
        %1251 = vmatmul.bf16.gmra.mxu0 %v652
        %v1252 = vpop.f32.mrf.mxu0
        %v1253 = vadd.f32 %v1164, %v1252
        %v1254 = vpop.f32.mrf.mxu0
        %v1255 = vadd.f32 %v1166, %v1254
        %1256 = vmatmul.bf16.gmra.mxu0 %v656
        %v1257 = vpop.f32.mrf.mxu0
        %v1258 = vadd.f32 %v1169, %v1257
        %v1259 = vpop.f32.mrf.mxu0
        %v1260 = vadd.f32 %v1171, %v1259
        %1261 = vmatmul.bf16.gmra.mxu0 %v660
        %v1262 = vpop.f32.mrf.mxu0
        %v1263 = vadd.f32 %v1174, %v1262
        %v1264 = vpop.f32.mrf.mxu0
        %v1265 = vadd.f32 %v1176, %v1264
        %1266 = vmatmul.bf16.gmra.mxu0 %v664
        %v1267 = vpop.f32.mrf.mxu0
        %v1268 = vadd.f32 %v1179, %v1267
        %v1269 = vpop.f32.mrf.mxu0
        %v1270 = vadd.f32 %v1181, %v1269
        %1271 = vmatmul.bf16.gmra.mxu0 %v668
        %v1272 = vpop.f32.mrf.mxu0
        %v1273 = vadd.f32 %v1184, %v1272
        %v1274 = vpop.f32.mrf.mxu0
        %v1275 = vadd.f32 %v1186, %v1274
        %1276 = vmatmul.bf16.gmra.mxu0 %v672
        %v1277 = vpop.f32.mrf.mxu0
        %v1278 = vadd.f32 %v1189, %v1277
        %v1279 = vpop.f32.mrf.mxu0
        %v1280 = vadd.f32 %v1191, %v1279
        %1281 = vmatmul.bf16.gmra.mxu0 %v676
        %v1282 = vpop.f32.mrf.mxu0
        %v1283 = vadd.f32 %v1194, %v1282
        %v1284 = vpop.f32.mrf.mxu0
        %v1285 = vadd.f32 %v1196, %v1284
        %1286 = vmatmul.bf16.gmra.mxu0 %v680
        %v1287 = vpop.f32.mrf.mxu0
        %v1288 = vadd.f32 %v1199, %v1287
        %v1289 = vpop.f32.mrf.mxu0
        %v1290 = vadd.f32 %v1201, %v1289
        %1291 = vmatmul.bf16.gmra.mxu0 %v684
        %v1292 = vpop.f32.mrf.mxu0
        %v1293 = vadd.f32 %v1204, %v1292
        %v1294 = vpop.f32.mrf.mxu0
        %v1295 = vadd.f32 %v1206, %v1294
        %1296 = vdwg.mxu0
        %v1297 = vadd.f32 %v333, %v1218
        %v1298 = vadd.f32 %v334, %v1220
        %v1299 = vadd.f32 %v335, %v1223
        %v1300 = vadd.f32 %v336, %v1225
        %v1301 = vadd.f32 %v337, %v1228
        %v1302 = vadd.f32 %v338, %v1230
        %v1303 = vadd.f32 %v339, %v1233
        %v1304 = vadd.f32 %v340, %v1235
        %v1305 = vadd.f32 %v341, %v1238
        %v1306 = vadd.f32 %v342, %v1240
        %v1307 = vadd.f32 %v343, %v1243
        %v1308 = vadd.f32 %v344, %v1245
        %v1309 = vadd.f32 %v345, %v1248
        %v1310 = vadd.f32 %v346, %v1250
        %v1311 = vadd.f32 %v347, %v1253
        %v1312 = vadd.f32 %v348, %v1255
        %v1313 = vadd.f32 %v349, %v1258
        %v1314 = vadd.f32 %v350, %v1260
        %v1315 = vadd.f32 %v351, %v1263
        %v1316 = vadd.f32 %v352, %v1265
        %v1317 = vadd.f32 %v353, %v1268
        %v1318 = vadd.f32 %v354, %v1270
        %v1319 = vadd.f32 %v355, %v1273
        %v1320 = vadd.f32 %v356, %v1275
        %v1321 = vadd.f32 %v357, %v1278
        %v1322 = vadd.f32 %v358, %v1280
        %v1323 = vadd.f32 %v359, %v1283
        %v1324 = vadd.f32 %v360, %v1285
        %v1325 = vadd.f32 %v361, %v1288
        %v1326 = vadd.f32 %v362, %v1290
        %v1327 = vadd.f32 %v363, %v1293
        %v1328 = vadd.f32 %v364, %v1295
        %1329 = vst [vmem:[#allocation2] sm:$0xff] %v1297
        %1330 = vst [vmem:[#allocation2 + $0x8] sm:$0xff] %v1298
        %1331 = vst [vmem:[#allocation2 + $0x10] sm:$0xff] %v1299
        %1332 = vst [vmem:[#allocation2 + $0x18] sm:$0xff] %v1300
        %1333 = vst [vmem:[#allocation2 + $0x20] sm:$0xff] %v1301
        %1334 = vst [vmem:[#allocation2 + $0x28] sm:$0xff] %v1302
        %1335 = vst [vmem:[#allocation2 + $0x30] sm:$0xff] %v1303
        %1336 = vst [vmem:[#allocation2 + $0x38] sm:$0xff] %v1304
        %1337 = vst [vmem:[#allocation2 + $0x40] sm:$0xff] %v1305
        %1338 = vst [vmem:[#allocation2 + $0x48] sm:$0xff] %v1306
        %1339 = vst [vmem:[#allocation2 + $0x50] sm:$0xff] %v1307
        %1340 = vst [vmem:[#allocation2 + $0x58] sm:$0xff] %v1308
        %1341 = vst [vmem:[#allocation2 + $0x60] sm:$0xff] %v1309
        %1342 = vst [vmem:[#allocation2 + $0x68] sm:$0xff] %v1310
        %1343 = vst [vmem:[#allocation2 + $0x70] sm:$0xff] %v1311
        %1344 = vst [vmem:[#allocation2 + $0x78] sm:$0xff] %v1312
        %1345 = vst [vmem:[#allocation2 + $0x80] sm:$0xff] %v1313
        %1346 = vst [vmem:[#allocation2 + $0x88] sm:$0xff] %v1314
        %1347 = vst [vmem:[#allocation2 + $0x90] sm:$0xff] %v1315
        %1348 = vst [vmem:[#allocation2 + $0x98] sm:$0xff] %v1316
        %1349 = vst [vmem:[#allocation2 + $0xa0] sm:$0xff] %v1317
        %1350 = vst [vmem:[#allocation2 + $0xa8] sm:$0xff] %v1318
        %1351 = vst [vmem:[#allocation2 + $0xb0] sm:$0xff] %v1319
        %1352 = vst [vmem:[#allocation2 + $0xb8] sm:$0xff] %v1320
        %1353 = vst [vmem:[#allocation2 + $0xc0] sm:$0xff] %v1321
        %1354 = vst [vmem:[#allocation2 + $0xc8] sm:$0xff] %v1322
        %1355 = vst [vmem:[#allocation2 + $0xd0] sm:$0xff] %v1323
        %1356 = vst [vmem:[#allocation2 + $0xd8] sm:$0xff] %v1324
        %1357 = vst [vmem:[#allocation2 + $0xe0] sm:$0xff] %v1325
        %1358 = vst [vmem:[#allocation2 + $0xe8] sm:$0xff] %v1326
        %1359 = vst [vmem:[#allocation2 + $0xf0] sm:$0xff] %v1327
        %1360 = vst [vmem:[#allocation2 + $0xf8] sm:$0xff] %v1328
        // Predicated region
        $region45: #{tpu_custom_call.1} parent=31 // pred_check
          %p1361 = pneg %p228
        $region46: #{tpu_custom_call.1} parent=31 // pred_check_branch
          %1363 = sbr.rel (%p1361) target = $region48
        $region47: #{tpu_custom_call.1} parent=31 // pred_region
          %v1364 = vld [vmem:[#allocation2] sm:$0xff]
          %v1365 = vld [vmem:[#allocation2 + $0x8] sm:$0xff]
          %v1366 = vld [vmem:[#allocation2 + $0x10] sm:$0xff]
          %v1367 = vld [vmem:[#allocation2 + $0x18] sm:$0xff]
          %v1368 = vld [vmem:[#allocation2 + $0x20] sm:$0xff]
          %v1369 = vld [vmem:[#allocation2 + $0x28] sm:$0xff]
          %v1370 = vld [vmem:[#allocation2 + $0x30] sm:$0xff]
          %v1371 = vld [vmem:[#allocation2 + $0x38] sm:$0xff]
          %v1372 = vld [vmem:[#allocation2 + $0x40] sm:$0xff]
          %v1373 = vld [vmem:[#allocation2 + $0x48] sm:$0xff]
          %v1374 = vld [vmem:[#allocation2 + $0x50] sm:$0xff]
          %v1375 = vld [vmem:[#allocation2 + $0x58] sm:$0xff]
          %v1376 = vld [vmem:[#allocation2 + $0x60] sm:$0xff]
          %v1377 = vld [vmem:[#allocation2 + $0x68] sm:$0xff]
          %v1378 = vld [vmem:[#allocation2 + $0x70] sm:$0xff]
          %v1379 = vld [vmem:[#allocation2 + $0x78] sm:$0xff]
          %v1380 = vld [vmem:[#allocation2 + $0x80] sm:$0xff]
          %v1381 = vld [vmem:[#allocation2 + $0x88] sm:$0xff]
          %v1382 = vld [vmem:[#allocation2 + $0x90] sm:$0xff]
          %v1383 = vld [vmem:[#allocation2 + $0x98] sm:$0xff]
          %v1384 = vld [vmem:[#allocation2 + $0xa0] sm:$0xff]
          %v1385 = vld [vmem:[#allocation2 + $0xa8] sm:$0xff]
          %v1386 = vld [vmem:[#allocation2 + $0xb0] sm:$0xff]
          %v1387 = vld [vmem:[#allocation2 + $0xb8] sm:$0xff]
          %v1388 = vld [vmem:[#allocation2 + $0xc0] sm:$0xff]
          %v1389 = vld [vmem:[#allocation2 + $0xc8] sm:$0xff]
          %v1390 = vld [vmem:[#allocation2 + $0xd0] sm:$0xff]
          %v1391 = vld [vmem:[#allocation2 + $0xd8] sm:$0xff]
          %v1392 = vld [vmem:[#allocation2 + $0xe0] sm:$0xff]
          %v1393 = vld [vmem:[#allocation2 + $0xe8] sm:$0xff]
          %v1394 = vld [vmem:[#allocation2 + $0xf0] sm:$0xff]
          %v1395 = vld [vmem:[#allocation2 + $0xf8] sm:$0xff]
          %v1396 = vld [vmem:[%s2] sm:$0x1]
          %v1398 = vperm.slane %v1396, 0
          %v1400 = vadd.f32 %v1364, %v1398
          %v1401 = vadd.f32 %v1365, %v1398
          %v1402 = vadd.f32 %v1366, %v1398
          %v1403 = vadd.f32 %v1367, %v1398
          %v1404 = vadd.f32 %v1368, %v1398
          %v1405 = vadd.f32 %v1369, %v1398
          %v1406 = vadd.f32 %v1370, %v1398
          %v1407 = vadd.f32 %v1371, %v1398
          %v1408 = vadd.f32 %v1372, %v1398
          %v1409 = vadd.f32 %v1373, %v1398
          %v1410 = vadd.f32 %v1374, %v1398
          %v1411 = vadd.f32 %v1375, %v1398
          %v1412 = vadd.f32 %v1376, %v1398
          %v1413 = vadd.f32 %v1377, %v1398
          %v1414 = vadd.f32 %v1378, %v1398
          %v1415 = vadd.f32 %v1379, %v1398
          %v1416 = vadd.f32 %v1380, %v1398
          %v1417 = vadd.f32 %v1381, %v1398
          %v1418 = vadd.f32 %v1382, %v1398
          %v1419 = vadd.f32 %v1383, %v1398
          %v1420 = vadd.f32 %v1384, %v1398
          %v1421 = vadd.f32 %v1385, %v1398
          %v1422 = vadd.f32 %v1386, %v1398
          %v1423 = vadd.f32 %v1387, %v1398
          %v1424 = vadd.f32 %v1388, %v1398
          %v1425 = vadd.f32 %v1389, %v1398
          %v1426 = vadd.f32 %v1390, %v1398
          %v1427 = vadd.f32 %v1391, %v1398
          %v1428 = vadd.f32 %v1392, %v1398
          %v1429 = vadd.f32 %v1393, %v1398
          %v1430 = vadd.f32 %v1394, %v1398
          %v1431 = vadd.f32 %v1395, %v1398
          %v1432 = vmax.f32 %v1400, 0.0
          %v1433 = vmax.f32 %v1401, 0.0
          %v1434 = vmax.f32 %v1402, 0.0
          %v1435 = vmax.f32 %v1403, 0.0
          %v1436 = vmax.f32 %v1404, 0.0
          %v1437 = vmax.f32 %v1405, 0.0
          %v1438 = vmax.f32 %v1406, 0.0
          %v1439 = vmax.f32 %v1407, 0.0
          %v1440 = vmax.f32 %v1408, 0.0
          %v1441 = vmax.f32 %v1409, 0.0
          %v1442 = vmax.f32 %v1410, 0.0
          %v1443 = vmax.f32 %v1411, 0.0
          %v1444 = vmax.f32 %v1412, 0.0
          %v1445 = vmax.f32 %v1413, 0.0
          %v1446 = vmax.f32 %v1414, 0.0
          %v1447 = vmax.f32 %v1415, 0.0
          %v1448 = vmax.f32 %v1416, 0.0
          %v1449 = vmax.f32 %v1417, 0.0
          %v1450 = vmax.f32 %v1418, 0.0
          %v1451 = vmax.f32 %v1419, 0.0
          %v1452 = vmax.f32 %v1420, 0.0
          %v1453 = vmax.f32 %v1421, 0.0
          %v1454 = vmax.f32 %v1422, 0.0
          %v1455 = vmax.f32 %v1423, 0.0
          %v1456 = vmax.f32 %v1424, 0.0
          %v1457 = vmax.f32 %v1425, 0.0
          %v1458 = vmax.f32 %v1426, 0.0
          %v1459 = vmax.f32 %v1427, 0.0
          %v1460 = vmax.f32 %v1428, 0.0
          %v1461 = vmax.f32 %v1429, 0.0
          %v1462 = vmax.f32 %v1430, 0.0
          %v1463 = vmax.f32 %v1431, 0.0
          %v1464 = vpack.c.bf16 %v1432, %v1432
          %v1465 = vpack.c.bf16 %v1433, %v1433
          %v1466 = vpack.c.bf16 %v1434, %v1434
          %v1467 = vpack.c.bf16 %v1435, %v1435
          %v1468 = vpack.c.bf16 %v1436, %v1436
          %v1469 = vpack.c.bf16 %v1437, %v1437
          %v1470 = vpack.c.bf16 %v1438, %v1438
          %v1471 = vpack.c.bf16 %v1439, %v1439
          %v1472 = vpack.c.bf16 %v1440, %v1440
          %v1473 = vpack.c.bf16 %v1441, %v1441
          %v1474 = vpack.c.bf16 %v1442, %v1442
          %v1475 = vpack.c.bf16 %v1443, %v1443
          %v1476 = vpack.c.bf16 %v1444, %v1444
          %v1477 = vpack.c.bf16 %v1445, %v1445
          %v1478 = vpack.c.bf16 %v1446, %v1446
          %v1479 = vpack.c.bf16 %v1447, %v1447
          %v1480 = vpack.c.bf16 %v1448, %v1448
          %v1481 = vpack.c.bf16 %v1449, %v1449
          %v1482 = vpack.c.bf16 %v1450, %v1450
          %v1483 = vpack.c.bf16 %v1451, %v1451
          %v1484 = vpack.c.bf16 %v1452, %v1452
          %v1485 = vpack.c.bf16 %v1453, %v1453
          %v1486 = vpack.c.bf16 %v1454, %v1454
          %v1487 = vpack.c.bf16 %v1455, %v1455
          %v1488 = vpack.c.bf16 %v1456, %v1456
          %v1489 = vpack.c.bf16 %v1457, %v1457
          %v1490 = vpack.c.bf16 %v1458, %v1458
          %v1491 = vpack.c.bf16 %v1459, %v1459
          %v1492 = vpack.c.bf16 %v1460, %v1460
          %v1493 = vpack.c.bf16 %v1461, %v1461
          %v1494 = vpack.c.bf16 %v1462, %v1462
          %v1495 = vpack.c.bf16 %v1463, %v1463
          %1496 = vst [vmem:[%s224] sm:$0xf] %v1464
          %1497 = vst [vmem:[%s224 + $0x4] sm:$0xf] %v1465
          %1498 = vst [vmem:[%s224 + $0x8] sm:$0xf] %v1466
          %1499 = vst [vmem:[%s224 + $0xc] sm:$0xf] %v1467
          %1500 = vst [vmem:[%s224 + $0x10] sm:$0xf] %v1468
          %1501 = vst [vmem:[%s224 + $0x14] sm:$0xf] %v1469
          %1502 = vst [vmem:[%s224 + $0x18] sm:$0xf] %v1470
          %1503 = vst [vmem:[%s224 + $0x1c] sm:$0xf] %v1471
          %1504 = vst [vmem:[%s224 + $0x20] sm:$0xf] %v1472
          %1505 = vst [vmem:[%s224 + $0x24] sm:$0xf] %v1473
          %1506 = vst [vmem:[%s224 + $0x28] sm:$0xf] %v1474
          %1507 = vst [vmem:[%s224 + $0x2c] sm:$0xf] %v1475
          %1508 = vst [vmem:[%s224 + $0x30] sm:$0xf] %v1476
          %1509 = vst [vmem:[%s224 + $0x34] sm:$0xf] %v1477
          %1510 = vst [vmem:[%s224 + $0x38] sm:$0xf] %v1478
          %1511 = vst [vmem:[%s224 + $0x3c] sm:$0xf] %v1479
          %1512 = vst [vmem:[%s224 + $0x40] sm:$0xf] %v1480
          %1513 = vst [vmem:[%s224 + $0x44] sm:$0xf] %v1481
          %1514 = vst [vmem:[%s224 + $0x48] sm:$0xf] %v1482
          %1515 = vst [vmem:[%s224 + $0x4c] sm:$0xf] %v1483
          %1516 = vst [vmem:[%s224 + $0x50] sm:$0xf] %v1484
          %1517 = vst [vmem:[%s224 + $0x54] sm:$0xf] %v1485
          %1518 = vst [vmem:[%s224 + $0x58] sm:$0xf] %v1486
          %1519 = vst [vmem:[%s224 + $0x5c] sm:$0xf] %v1487
          %1520 = vst [vmem:[%s224 + $0x60] sm:$0xf] %v1488
          %1521 = vst [vmem:[%s224 + $0x64] sm:$0xf] %v1489
          %1522 = vst [vmem:[%s224 + $0x68] sm:$0xf] %v1490
          %1523 = vst [vmem:[%s224 + $0x6c] sm:$0xf] %v1491
          %1524 = vst [vmem:[%s224 + $0x70] sm:$0xf] %v1492
          %1525 = vst [vmem:[%s224 + $0x74] sm:$0xf] %v1493
          %1526 = vst [vmem:[%s224 + $0x78] sm:$0xf] %v1494
          %1527 = vst [vmem:[%s224 + $0x7c] sm:$0xf] %v1495
        $region48: #{tpu_custom_call.1} parent=31 // pred_fallthru
          _
        %s1528 = sand.u32 %s111, 1
        %s1529 = scalar_lea.sflag [#allocation5], %s1528
        %s1530 = sand.u32 %s111, 1
        %s1531 = smul.addr %s1530, 128
        %s1532 = scalar_lea.vmem [#allocation8], %s1531
        // Predicated region
        $region49: #{tpu_custom_call.1} parent=31 // pred_check
          %p1533 = pneg %p121
        $region50: #{tpu_custom_call.1} parent=31 // pred_check_branch
          %1535 = sbr.rel (%p1533) target = $region52
        $region51: #{tpu_custom_call.1} parent=31 // pred_region
          %s1536 = smul.u32 32, %s25
          %1538 = vsyncadd %s1529, 0
          %s1539 = smul.addr %s1536, 4
          %s1540 = scalar_lea.hbm %s3, %s1539
          %s1541 = sshll.u32 %s1532, 4
          %s1542 = int_to_ptr.vmem [resolvable:$true] %s1541
          %s1543 = sshll.u32 %s1540, 4
          %s1544 = int_to_ptr.hbm [resolvable:$true] %s1543
          %1549 = dma.vmem_to_hbm [thread:$0]  %s1542, 2048, %s1544, %s1529, 64, 64, 4
        $region52: #{tpu_custom_call.1} parent=31 // pred_fallthru
          _
      $region32: #{tpu_custom_call.1} parent=5 // pred_fallthru
        _
      %p1550 = scmp.le.s32.totalorder 2, %s16
      // Predicated region
      $region53: #{tpu_custom_call.1} parent=5 // pred_check
        %p1551 = pneg %p1550
      $region54: #{tpu_custom_call.1} parent=5 // pred_check_branch
        %1553 = sbr.rel (%p1551) target = $region56
      $region55: #{tpu_custom_call.1} parent=5 // pred_region
        %s1554 = ssub.s32 %s16, 2
        // Predicated region
        $region57: #{tpu_custom_call.1} parent=55 // pred_check
          %p1555 = pneg %p127
        $region58: #{tpu_custom_call.1} parent=55 // pred_check_branch
          %1557 = sbr.rel (%p1555) target = $region60
        $region59: #{tpu_custom_call.1} parent=55 // pred_region
          %s1558 = sand.u32 %s112, 1
          %s1559 = scalar_lea.sflag [#allocation5], %s1558
          %s1560 = sand.u32 %s112, 1
          %s1561 = smul.addr %s1560, 128
          %s1562 = scalar_lea.vmem [#allocation8], %s1561
          %1564 = dma.done %s1559, 2048
        $region60: #{tpu_custom_call.1} parent=55 // pred_fallthru
          _
      $region56: #{tpu_custom_call.1} parent=5 // pred_fallthru
        _
    $region6: #{tpu_custom_call.1} parent=1 // loop_footer
      %s20 = sadd.s32 1, %s16
    $region7: #{tpu_custom_call.1} parent=1 // loop_footer_branch
      %15 = sbr.rel target = $region3
    $region8: #{tpu_custom_call.1} parent=1 // loop_exit
      _
    %1565 = vsyncpa [#allocation4], 1
    %s1566 = scalar_lea.sflag [#allocation4], 1
    %1567 = vsyncpa %s1566, 1
    %1568 = vsyncpa [#allocation7], 1
    %1569 = vsyncpa [#allocation5], 1
    %s1570 = scalar_lea.sflag [#allocation5], 1
    %1571 = vsyncpa %s1570, 1

</llo_original>
